<compile_context>
chip_gen: v6e
topology: v6e:2x2x1
jax: 0.10.0
libtpu: 0.0.40
codegen_flags: <defaults>
</compile_context>

<pallas_src>
import functools

import jax
import jax.numpy as jnp
from jax.experimental import pallas as pl
from jax.experimental.pallas import tpu as pltpu


# ----------------------------------------------------------------------------
# Kernel
# ----------------------------------------------------------------------------
def _revgrad_kernel(x_ref,
                    w0_ref, b0_ref,          # backbone stand-in
                    w1_ref, b1_ref,          # [class|domain] first layers, BN folded
                    wc2_ref, bc2_ref,        # class second layer, BN folded
                    wc3_ref, wd2_ref, bout_ref,   # final layers -> shared slab
                    out_ref):
    x = x_ref[...]                                            # (tb, d_in) bf16

    # Backbone stand-in: Linear(d_in -> 512), f32 accumulation on the MXU.
    feat = jnp.dot(x, w0_ref[...],
                   preferred_element_type=jnp.float32) + b0_ref[...]
    # ReverseLayerF: identity in the forward pass.
    feat_bf = feat.astype(jnp.bfloat16)

    # First Linear of BOTH heads fused into one (512, 2*HP) matmul (BN folded).
    h1 = jnp.dot(feat_bf, w1_ref[...],
                 preferred_element_type=jnp.float32) + b1_ref[...]
    h1 = jnp.maximum(h1, 0.0)                                 # ReLU
    hp = wc2_ref.shape[0]                                     # padded hidden (128)
    hc = h1[:, :hp]                                           # class-head hidden
    hd = h1[:, hp:]                                           # domain-head hidden

    # Class head: Dropout2d is identity in eval; second Linear + folded BN + ReLU.
    h2 = jnp.dot(hc.astype(jnp.bfloat16), wc2_ref[...],
                 preferred_element_type=jnp.float32) + bc2_ref[...]
    h2 = jnp.maximum(h2, 0.0)

    # Final layers of both heads occupy disjoint lanes of one 128-wide slab:
    # lanes [0:num_class] = class logits, lanes [num_class:num_class+2] = domain.
    out = (jnp.dot(h2.astype(jnp.bfloat16), wc3_ref[...],
                   preferred_element_type=jnp.float32)
           + jnp.dot(hd.astype(jnp.bfloat16), wd2_ref[...],
                     preferred_element_type=jnp.float32)
           + bout_ref[...])
    out_ref[...] = out.astype(out_ref.dtype)                  # full-lane store


# ----------------------------------------------------------------------------
# Host-side parameter glue
# ----------------------------------------------------------------------------
def _round_up(n, m):
    return (n + m - 1) // m * m


def _bn_fold(w, b, bn_params, eps=1e-5):
    """Fold inference-mode BatchNorm1d into the preceding Linear (w, b)."""
    gamma, beta, mean, var = bn_params
    s = gamma / jnp.sqrt(var + eps)
    return w * s[None, :], b * s + (beta - mean * s)


def _pad2(w, rows, cols):
    return jnp.zeros((rows, cols), w.dtype).at[:w.shape[0], :w.shape[1]].set(w)


def _pad1(b, cols, offset=0):
    return jnp.zeros((cols,), b.dtype).at[offset:offset + b.shape[0]].set(b)


@functools.partial(jax.jit, static_argnames=("tb_max",))
def revgrad_onestep_forward(x_img, params, alpha=0.0, *, tb_max=256):
    """x_img: (B, C, H, W) float32 (NCHW). Returns (class_output, domain_output)."""
    del alpha  # only affects the backward pass of ReverseLayerF
    B = x_img.shape[0]
    x = x_img.reshape(B, -1)
    d_in = x.shape[1]

    n_init = params["w0"].shape[1]
    hidden = params["wc1"].shape[1]
    num_class = params["wc3"].shape[1]

    NP = _round_up(n_init, 128)           # padded feature width (512)
    HP = _round_up(hidden, 128)           # padded hidden width  (128)
    OUT_W = _round_up(num_class + 2, 128) # lane-dense output slab width (128)

    # Fold BN into the adjacent Linear layers (inference semantics).
    wc1f, bc1f = _bn_fold(params["wc1"], params["bc1"], params["bnc1"])
    wc2f, bc2f = _bn_fold(params["wc2"], params["bc2"], params["bnc2"])
    wd1f, bd1f = _bn_fold(params["wd1"], params["bd1"], params["bnd1"])

    bf16 = jnp.bfloat16
    # Backbone stand-in.
    w0 = _pad2(params["w0"], d_in, NP).astype(bf16)
    b0 = _pad1(params["b0"], NP).reshape(1, NP)
    # Fused first layers of both heads: columns [0:HP]=class, [HP:2HP]=domain.
    w1 = jnp.concatenate([_pad2(wc1f, NP, HP), _pad2(wd1f, NP, HP)],
                         axis=1).astype(bf16)
    b1 = jnp.concatenate([_pad1(bc1f, HP), _pad1(bd1f, HP)]).reshape(1, 2 * HP)
    # Class head second layer.
    wc2 = _pad2(wc2f, HP, HP).astype(bf16)
    bc2 = _pad1(bc2f, HP).reshape(1, HP)
    # Final layers mapped onto disjoint lanes of the output slab.
    wc3 = _pad2(params["wc3"], HP, OUT_W).astype(bf16)          # lanes [0:num_class]
    wd2 = jnp.zeros((HP, OUT_W), jnp.float32)
    wd2 = wd2.at[:hidden, num_class:num_class + 2].set(params["wd2"]).astype(bf16)
    bout = (_pad1(params["bc3"], OUT_W)
            + _pad1(params["bd2"], OUT_W, offset=num_class)).reshape(1, OUT_W)

    # Batch tiling: tb multiple of 16 (bf16 sublanes), pad B, grid = cdiv(B, tb).
    tb = min(tb_max, _round_up(B, 16))
    n_steps = pl.cdiv(B, tb)
    Bp = n_steps * tb
    x_p = jnp.zeros((Bp, d_in), bf16).at[:B, :].set(x.astype(bf16))

    weight_args = (w0, b0, w1, b1, wc2, bc2, wc3, wd2, bout)

    def const_spec(a):
        return pl.BlockSpec(a.shape, lambda i: (0, 0))

    out_slab = pl.pallas_call(
        _revgrad_kernel,
        out_shape=jax.ShapeDtypeStruct((Bp, OUT_W), jnp.float32),
        grid_spec=pltpu.PrefetchScalarGridSpec(
            num_scalar_prefetch=0,
            grid=(n_steps,),
            in_specs=[pl.BlockSpec((tb, d_in), lambda i: (i, 0))]
                     + [const_spec(a) for a in weight_args],
            out_specs=pl.BlockSpec((tb, OUT_W), lambda i: (i, 0)),
        ),
        compiler_params=pltpu.CompilerParams(
            dimension_semantics=("parallel",)),
    )(x_p, *weight_args)

    class_out = out_slab[:B, :num_class]
    domain_out = out_slab[:B, num_class:num_class + 2]
    return class_out, domain_out


# ----------------------------------------------------------------------------
# Synthetic parameters + pure-JAX reference (PyTorch eval-mode semantics)
# ----------------------------------------------------------------------------
def init_params(key, d_in, n_init=512, hidden=100, num_class=10):
    ks = jax.random.split(key, 16)

    def lin(k, fan_in, fan_out):
        k1, k2 = jax.random.split(k)
        lim = 1.0 / jnp.sqrt(fan_in)
        w = jax.random.uniform(k1, (fan_in, fan_out), jnp.float32, -lim, lim)
        b = jax.random.uniform(k2, (fan_out,), jnp.float32, -lim, lim)
        return w, b

    def bn(k, n):
        # Non-trivial (gamma, beta, running_mean, running_var) so BN folding is tested.
        k1, k2, k3, k4 = jax.random.split(k, 4)
        return (1.0 + 0.1 * jax.random.normal(k1, (n,), jnp.float32),
                0.3 * jax.random.normal(k2, (n,), jnp.float32),
                0.3 * jax.random.normal(k3, (n,), jnp.float32),
                jax.random.uniform(k4, (n,), jnp.float32, 0.5, 1.5))

    w0, b0 = lin(ks[0], d_in, n_init)        # backbone stand-in
    wc1, bc1 = lin(ks[1], n_init, hidden)
    wc2, bc2 = lin(ks[2], hidden, hidden)
    wc3, bc3 = lin(ks[3], hidden, num_class)
    wd1, bd1 = lin(ks[4], n_init, hidden)
    wd2, bd2 = lin(ks[5], hidden, 2)
    return dict(w0=w0, b0=b0,
                wc1=wc1, bc1=bc1, bnc1=bn(ks[6], hidden),
                wc2=wc2, bc2=bc2, bnc2=bn(ks[7], hidden),
                wc3=wc3, bc3=bc3,
                wd1=wd1, bd1=bd1, bnd1=bn(ks[8], hidden),
                wd2=wd2, bd2=bd2)


def _reference_forward(x_img, params):
    """Pure-JAX f32 reference matching the PyTorch module in eval mode."""
    x = x_img.reshape(x_img.shape[0], -1)
    feat = x @ params["w0"] + params["b0"]

    def bn_apply(v, bn_p):
        g, b, m, var = bn_p
        return (v - m) / jnp.sqrt(var + 1e-5) * g + b

    h = jnp.maximum(bn_apply(feat @ params["wc1"] + params["bc1"], params["bnc1"]), 0.0)
    h = jnp.maximum(bn_apply(h @ params["wc2"] + params["bc2"], params["bnc2"]), 0.0)
    cls = h @ params["wc3"] + params["bc3"]
    g = jnp.maximum(bn_apply(feat @ params["wd1"] + params["bd1"], params["bnd1"]), 0.0)
    dom = g @ params["wd2"] + params["bd2"]
    return cls, dom


if __name__ == "__main__":
    B, C, H, W = 8, 3, 16, 16
    NUM_CLASS = 10

    key = jax.random.PRNGKey(0)
    kx, kp = jax.random.split(key)
    x_img = jax.random.normal(kx, (B, C, H, W), dtype=jnp.float32)
    params = init_params(kp, d_in=C * H * W, n_init=512, hidden=100,
                         num_class=NUM_CLASS)

    class_out, domain_out = revgrad_onestep_forward(x_img, params, alpha=0.0)
    jax.block_until_ready((class_out, domain_out))

    assert class_out.shape == (B, NUM_CLASS) and domain_out.shape == (B, 2)
    ref_cls, ref_dom = _reference_forward(x_img, params)
    # bf16 weights/inputs with f32 accumulation vs. pure-f32 reference.
    assert jnp.allclose(class_out, ref_cls, atol=1.5e-2, rtol=2e-2), \
        float(jnp.max(jnp.abs(class_out - ref_cls)))
    assert jnp.allclose(domain_out, ref_dom, atol=1.5e-2, rtol=2e-2), \
        float(jnp.max(jnp.abs(domain_out - ref_dom)))

    print("KERNEL_OK")
</pallas_src>

<mosaic_0001>
module attributes {stable_mosaic.version = 11 : i64} {
  func.func @_revgrad_kernel(%arg0: i32, %arg1: memref<16x768xbf16, #tpu.memory_space<vmem>>, %arg2: memref<768x512xbf16, #tpu.memory_space<vmem>>, %arg3: memref<1x512xf32, #tpu.memory_space<vmem>>, %arg4: memref<512x256xbf16, #tpu.memory_space<vmem>>, %arg5: memref<1x256xf32, #tpu.memory_space<vmem>>, %arg6: memref<128x128xbf16, #tpu.memory_space<vmem>>, %arg7: memref<1x128xf32, #tpu.memory_space<vmem>>, %arg8: memref<128x128xbf16, #tpu.memory_space<vmem>>, %arg9: memref<128x128xbf16, #tpu.memory_space<vmem>>, %arg10: memref<1x128xf32, #tpu.memory_space<vmem>>, %arg11: memref<16x128xf32, #tpu.memory_space<vmem>>) attributes {dimension_semantics = [#tpu.dimension_semantics<parallel>], iteration_bounds = array<i64: 1>, scalar_prefetch = 0 : i64, scratch_operands = 0 : i64, tpu.core_type = #tpu.core_type<tc>, window_params = [{transform_indices = @transform_0, window_bounds = array<i64: 16, 768>}, {pipeline_mode = #tpu.pipeline_mode<synchronous>, transform_indices = @transform_1, window_bounds = array<i64: 768, 512>}, {pipeline_mode = #tpu.pipeline_mode<synchronous>, transform_indices = @transform_2, window_bounds = array<i64: 1, 512>}, {pipeline_mode = #tpu.pipeline_mode<synchronous>, transform_indices = @transform_3, window_bounds = array<i64: 512, 256>}, {pipeline_mode = #tpu.pipeline_mode<synchronous>, transform_indices = @transform_4, window_bounds = array<i64: 1, 256>}, {pipeline_mode = #tpu.pipeline_mode<synchronous>, transform_indices = @transform_5, window_bounds = array<i64: 128, 128>}, {pipeline_mode = #tpu.pipeline_mode<synchronous>, transform_indices = @transform_6, window_bounds = array<i64: 1, 128>}, {pipeline_mode = #tpu.pipeline_mode<synchronous>, transform_indices = @transform_7, window_bounds = array<i64: 128, 128>}, {pipeline_mode = #tpu.pipeline_mode<synchronous>, transform_indices = @transform_8, window_bounds = array<i64: 128, 128>}, {pipeline_mode = #tpu.pipeline_mode<synchronous>, transform_indices = @transform_9, window_bounds = array<i64: 1, 128>}, {transform_indices = @transform_10, window_bounds = array<i64: 16, 128>}]} {
    %c0 = arith.constant 0 : index
    %c0_0 = arith.constant 0 : index
    %0 = vector.load %arg1[%c0, %c0_0] : memref<16x768xbf16, #tpu.memory_space<vmem>>, vector<16x768xbf16>
    %c0_1 = arith.constant 0 : index
    %c0_2 = arith.constant 0 : index
    %1 = vector.load %arg2[%c0_1, %c0_2] : memref<768x512xbf16, #tpu.memory_space<vmem>>, vector<768x512xbf16>
    %cst = arith.constant dense<0.000000e+00> : vector<16x512xf32>
    %2 = tpu.matmul %0, %1, %cst {dimension_numbers = #tpu.dot_dimension_numbers<[1], [0], [0], [1], [0, 0, 1, 1], [], []>} : vector<16x768xbf16>, vector<768x512xbf16>, vector<16x512xf32> -> vector<16x512xf32>
    %c0_3 = arith.constant 0 : index
    %c0_4 = arith.constant 0 : index
    %3 = vector.load %arg3[%c0_3, %c0_4] : memref<1x512xf32, #tpu.memory_space<vmem>>, vector<1x512xf32>
    %4 = vector.broadcast %3 : vector<1x512xf32> to vector<16x512xf32>
    %5 = arith.addf %2, %4 : vector<16x512xf32>
    %6 = arith.truncf %5 : vector<16x512xf32> to vector<16x512xbf16>
    %c0_5 = arith.constant 0 : index
    %c0_6 = arith.constant 0 : index
    %7 = vector.load %arg4[%c0_5, %c0_6] : memref<512x256xbf16, #tpu.memory_space<vmem>>, vector<512x256xbf16>
    %cst_7 = arith.constant dense<0.000000e+00> : vector<16x256xf32>
    %8 = tpu.matmul %6, %7, %cst_7 {dimension_numbers = #tpu.dot_dimension_numbers<[1], [0], [0], [1], [0, 0, 1, 1], [], []>} : vector<16x512xbf16>, vector<512x256xbf16>, vector<16x256xf32> -> vector<16x256xf32>
    %c0_8 = arith.constant 0 : index
    %c0_9 = arith.constant 0 : index
    %9 = vector.load %arg5[%c0_8, %c0_9] : memref<1x256xf32, #tpu.memory_space<vmem>>, vector<1x256xf32>
    %10 = vector.broadcast %9 : vector<1x256xf32> to vector<16x256xf32>
    %11 = arith.addf %8, %10 : vector<16x256xf32>
    %cst_10 = arith.constant 0.000000e+00 : f32
    %12 = vector.broadcast %cst_10 : f32 to vector<16x256xf32>
    %13 = arith.maximumf %11, %12 : vector<16x256xf32>
    %14 = vector.extract_strided_slice %13 {offsets = [0, 0], sizes = [16, 128], strides = [1, 1]} : vector<16x256xf32> to vector<16x128xf32>
    %15 = vector.extract_strided_slice %13 {offsets = [0, 128], sizes = [16, 128], strides = [1, 1]} : vector<16x256xf32> to vector<16x128xf32>
    %16 = arith.truncf %14 : vector<16x128xf32> to vector<16x128xbf16>
    %c0_11 = arith.constant 0 : index
    %c0_12 = arith.constant 0 : index
    %17 = vector.load %arg6[%c0_11, %c0_12] : memref<128x128xbf16, #tpu.memory_space<vmem>>, vector<128x128xbf16>
    %cst_13 = arith.constant dense<0.000000e+00> : vector<16x128xf32>
    %18 = tpu.matmul %16, %17, %cst_13 {dimension_numbers = #tpu.dot_dimension_numbers<[1], [0], [0], [1], [0, 0, 1, 1], [], []>} : vector<16x128xbf16>, vector<128x128xbf16>, vector<16x128xf32> -> vector<16x128xf32>
    %c0_14 = arith.constant 0 : index
    %c0_15 = arith.constant 0 : index
    %19 = vector.load %arg7[%c0_14, %c0_15] : memref<1x128xf32, #tpu.memory_space<vmem>>, vector<1x128xf32>
    %20 = vector.broadcast %19 : vector<1x128xf32> to vector<16x128xf32>
    %21 = arith.addf %18, %20 : vector<16x128xf32>
    %cst_16 = arith.constant 0.000000e+00 : f32
    %22 = vector.broadcast %cst_16 : f32 to vector<16x128xf32>
    %23 = arith.maximumf %21, %22 : vector<16x128xf32>
    %24 = arith.truncf %23 : vector<16x128xf32> to vector<16x128xbf16>
    %c0_17 = arith.constant 0 : index
    %c0_18 = arith.constant 0 : index
    %25 = vector.load %arg8[%c0_17, %c0_18] : memref<128x128xbf16, #tpu.memory_space<vmem>>, vector<128x128xbf16>
    %cst_19 = arith.constant dense<0.000000e+00> : vector<16x128xf32>
    %26 = tpu.matmul %24, %25, %cst_19 {dimension_numbers = #tpu.dot_dimension_numbers<[1], [0], [0], [1], [0, 0, 1, 1], [], []>} : vector<16x128xbf16>, vector<128x128xbf16>, vector<16x128xf32> -> vector<16x128xf32>
    %27 = arith.truncf %15 : vector<16x128xf32> to vector<16x128xbf16>
    %c0_20 = arith.constant 0 : index
    %c0_21 = arith.constant 0 : index
    %28 = vector.load %arg9[%c0_20, %c0_21] : memref<128x128xbf16, #tpu.memory_space<vmem>>, vector<128x128xbf16>
    %cst_22 = arith.constant dense<0.000000e+00> : vector<16x128xf32>
    %29 = tpu.matmul %27, %28, %cst_22 {dimension_numbers = #tpu.dot_dimension_numbers<[1], [0], [0], [1], [0, 0, 1, 1], [], []>} : vector<16x128xbf16>, vector<128x128xbf16>, vector<16x128xf32> -> vector<16x128xf32>
    %30 = arith.addf %26, %29 : vector<16x128xf32>
    %c0_23 = arith.constant 0 : index
    %c0_24 = arith.constant 0 : index
    %31 = vector.load %arg10[%c0_23, %c0_24] : memref<1x128xf32, #tpu.memory_space<vmem>>, vector<1x128xf32>
    %32 = vector.broadcast %31 : vector<1x128xf32> to vector<16x128xf32>
    %33 = arith.addf %30, %32 : vector<16x128xf32>
    %c0_25 = arith.constant 0 : index
    %c0_26 = arith.constant 0 : index
    %34 = vector.load %arg11[%c0_25, %c0_26] : memref<16x128xf32, #tpu.memory_space<vmem>>, vector<16x128xf32>
    tpu.vector_store %arg11[%c0_25, %c0_26], %33 {strides = array<i32>} : memref<16x128xf32, #tpu.memory_space<vmem>>, vector<16x128xf32>,
    return
  }
  func.func @transform_0(%arg0: i32) -> (i32, i32) {
    %c0_i32 = arith.constant 0 : i32
    %c0_i32_0 = arith.constant 0 : i32
    return %arg0, %c0_i32 : i32, i32
  }
  func.func @transform_1(%arg0: i32) -> (i32, i32) {
    %c0_i32 = arith.constant 0 : i32
    %c0_i32_0 = arith.constant 0 : i32
    %c0_i32_1 = arith.constant 0 : i32
    return %c0_i32, %c0_i32_0 : i32, i32
  }
  func.func @transform_2(%arg0: i32) -> (i32, i32) {
    %c0_i32 = arith.constant 0 : i32
    %c0_i32_0 = arith.constant 0 : i32
    %c0_i32_1 = arith.constant 0 : i32
    return %c0_i32, %c0_i32_0 : i32, i32
  }
  func.func @transform_3(%arg0: i32) -> (i32, i32) {
    %c0_i32 = arith.constant 0 : i32
    %c0_i32_0 = arith.constant 0 : i32
    %c0_i32_1 = arith.constant 0 : i32
    return %c0_i32, %c0_i32_0 : i32, i32
  }
  func.func @transform_4(%arg0: i32) -> (i32, i32) {
    %c0_i32 = arith.constant 0 : i32
    %c0_i32_0 = arith.constant 0 : i32
    %c0_i32_1 = arith.constant 0 : i32
    return %c0_i32, %c0_i32_0 : i32, i32
  }
  func.func @transform_5(%arg0: i32) -> (i32, i32) {
    %c0_i32 = arith.constant 0 : i32
    %c0_i32_0 = arith.constant 0 : i32
    %c0_i32_1 = arith.constant 0 : i32
    return %c0_i32, %c0_i32_0 : i32, i32
  }
  func.func @transform_6(%arg0: i32) -> (i32, i32) {
    %c0_i32 = arith.constant 0 : i32
    %c0_i32_0 = arith.constant 0 : i32
    %c0_i32_1 = arith.constant 0 : i32
    return %c0_i32, %c0_i32_0 : i32, i32
  }
  func.func @transform_7(%arg0: i32) -> (i32, i32) {
    %c0_i32 = arith.constant 0 : i32
    %c0_i32_0 = arith.constant 0 : i32
    %c0_i32_1 = arith.constant 0 : i32
    return %c0_i32, %c0_i32_0 : i32, i32
  }
  func.func @transform_8(%arg0: i32) -> (i32, i32) {
    %c0_i32 = arith.constant 0 : i32
    %c0_i32_0 = arith.constant 0 : i32
    %c0_i32_1 = arith.constant 0 : i32
    return %c0_i32, %c0_i32_0 : i32, i32
  }
  func.func @transform_9(%arg0: i32) -> (i32, i32) {
    %c0_i32 = arith.constant 0 : i32
    %c0_i32_0 = arith.constant 0 : i32
    %c0_i32_1 = arith.constant 0 : i32
    return %c0_i32, %c0_i32_0 : i32, i32
  }
  func.func @transform_10(%arg0: i32) -> (i32, i32) {
    %c0_i32 = arith.constant 0 : i32
    %c0_i32_0 = arith.constant 0 : i32
    return %arg0, %c0_i32 : i32, i32
  }
}

</mosaic_0001>

<llo_original>
// kernel: revgrad_onestep_forward.1
$region0: #{revgrad_onestep_forward.1}
  #allocation0 [shape = 'u32[]', space=smem, size = 0x4, offset = 0x4, fixed_abs, tag = 'smem constant byte address 0x4 - core index']
  #allocation1 [shape = 'u32[144,128]{1,0:T(1,128)}', space=vmem, size = 0x12000, scoped, tag = 'internal scratch']
  %s0 = inlined_call_operand.vmem [shape: bf16[16,768], index: 0, kind: input, shape index: {}]
  %s1 = inlined_call_operand.vmem [shape: bf16[768,512], index: 1, kind: input, shape index: {}]
  %s2 = inlined_call_operand.vmem [shape: f32[1,512], index: 2, kind: input, shape index: {}]
  %s3 = inlined_call_operand.vmem [shape: bf16[512,256], index: 3, kind: input, shape index: {}]
  %s4 = inlined_call_operand.vmem [shape: f32[1,256], index: 4, kind: input, shape index: {}]
  %s5 = inlined_call_operand.vmem [shape: bf16[128,128], index: 5, kind: input, shape index: {}]
  %s6 = inlined_call_operand.vmem [shape: f32[1,128], index: 6, kind: input, shape index: {}]
  %s7 = inlined_call_operand.vmem [shape: bf16[128,128], index: 7, kind: input, shape index: {}]
  %s8 = inlined_call_operand.vmem [shape: bf16[128,128], index: 8, kind: input, shape index: {}]
  %s9 = inlined_call_operand.vmem [shape: f32[1,128], index: 9, kind: input, shape index: {}]
  %s10 = inlined_call_operand.vmem [shape: f32[16,128], index: 10, kind: output, shape index: {}]
  %s11 = sld [smem:[#allocation0]]
  $region50: #{revgrad_onestep_forward.1} parent=0
    _
  %s13 = ssub.s32 1, %s11
  %s14 = scalar_select 0, %s13, %s11
  // Predicated region
  $region2: #{revgrad_onestep_forward.1} parent=0 // pred_check
    _
  $region3: #{revgrad_onestep_forward.1} parent=0 // pred_check_branch
    %16 = sbr.rel (0) target = $region5
  $region4: #{revgrad_onestep_forward.1} parent=0 // pred_region
    _
  $region5: #{revgrad_onestep_forward.1} parent=0 // pred_fallthru
    _
  // Predicated region
  $region6: #{revgrad_onestep_forward.1} parent=0 // pred_check
    _
  $region7: #{revgrad_onestep_forward.1} parent=0 // pred_check_branch
    %18 = sbr.rel (0) target = $region9
  $region8: #{revgrad_onestep_forward.1} parent=0 // pred_region
    _
  $region9: #{revgrad_onestep_forward.1} parent=0 // pred_fallthru
    _
  // Predicated region
  $region10: #{revgrad_onestep_forward.1} parent=0 // pred_check
    _
  $region11: #{revgrad_onestep_forward.1} parent=0 // pred_check_branch
    %20 = sbr.rel (0) target = $region13
  $region12: #{revgrad_onestep_forward.1} parent=0 // pred_region
    _
  $region13: #{revgrad_onestep_forward.1} parent=0 // pred_fallthru
    _
  // Predicated region
  $region14: #{revgrad_onestep_forward.1} parent=0 // pred_check
    _
  $region15: #{revgrad_onestep_forward.1} parent=0 // pred_check_branch
    %22 = sbr.rel (0) target = $region17
  $region16: #{revgrad_onestep_forward.1} parent=0 // pred_region
    _
  $region17: #{revgrad_onestep_forward.1} parent=0 // pred_fallthru
    _
  // Predicated region
  $region18: #{revgrad_onestep_forward.1} parent=0 // pred_check
    _
  $region19: #{revgrad_onestep_forward.1} parent=0 // pred_check_branch
    %24 = sbr.rel (0) target = $region21
  $region20: #{revgrad_onestep_forward.1} parent=0 // pred_region
    _
  $region21: #{revgrad_onestep_forward.1} parent=0 // pred_fallthru
    _
  // Predicated region
  $region22: #{revgrad_onestep_forward.1} parent=0 // pred_check
    _
  $region23: #{revgrad_onestep_forward.1} parent=0 // pred_check_branch
    %26 = sbr.rel (0) target = $region25
  $region24: #{revgrad_onestep_forward.1} parent=0 // pred_region
    _
  $region25: #{revgrad_onestep_forward.1} parent=0 // pred_fallthru
    _
  // Predicated region
  $region26: #{revgrad_onestep_forward.1} parent=0 // pred_check
    _
  $region27: #{revgrad_onestep_forward.1} parent=0 // pred_check_branch
    %28 = sbr.rel (0) target = $region29
  $region28: #{revgrad_onestep_forward.1} parent=0 // pred_region
    _
  $region29: #{revgrad_onestep_forward.1} parent=0 // pred_fallthru
    _
  // Predicated region
  $region30: #{revgrad_onestep_forward.1} parent=0 // pred_check
    _
  $region31: #{revgrad_onestep_forward.1} parent=0 // pred_check_branch
    %30 = sbr.rel (0) target = $region33
  $region32: #{revgrad_onestep_forward.1} parent=0 // pred_region
    _
  $region33: #{revgrad_onestep_forward.1} parent=0 // pred_fallthru
    _
  // Predicated region
  $region34: #{revgrad_onestep_forward.1} parent=0 // pred_check
    _
  $region35: #{revgrad_onestep_forward.1} parent=0 // pred_check_branch
    %32 = sbr.rel (0) target = $region37
  $region36: #{revgrad_onestep_forward.1} parent=0 // pred_region
    _
  $region37: #{revgrad_onestep_forward.1} parent=0 // pred_fallthru
    _
  // Predicated region
  $region38: #{revgrad_onestep_forward.1} parent=0 // pred_check
    _
  $region39: #{revgrad_onestep_forward.1} parent=0 // pred_check_branch
    %34 = sbr.rel (0) target = $region41
  $region40: #{revgrad_onestep_forward.1} parent=0 // pred_region
    _
  $region41: #{revgrad_onestep_forward.1} parent=0 // pred_fallthru
    _
  %v36 = vld [vmem:[%s0] sm:$0xff]
  %v37 = vld [vmem:[%s0 + $0x8] sm:$0xff]
  %v38 = vld [vmem:[%s0 + $0x10] sm:$0xff]
  %v39 = vld [vmem:[%s0 + $0x18] sm:$0xff]
  %v40 = vld [vmem:[%s0 + $0x20] sm:$0xff]
  %v41 = vld [vmem:[%s0 + $0x28] sm:$0xff]
  %v42 = vld [vmem:[%s1] sm:$0xff]
  %v43 = vld [vmem:[%s1 + $0x8] sm:$0xff]
  %v44 = vld [vmem:[%s1 + $0x10] sm:$0xff]
  %v45 = vld [vmem:[%s1 + $0x18] sm:$0xff]
  %v46 = vld [vmem:[%s1 + $0x20] sm:$0xff]
  %v47 = vld [vmem:[%s1 + $0x28] sm:$0xff]
  %v48 = vld [vmem:[%s1 + $0x30] sm:$0xff]
  %v49 = vld [vmem:[%s1 + $0x38] sm:$0xff]
  %v50 = vld [vmem:[%s1 + $0x40] sm:$0xff]
  %v51 = vld [vmem:[%s1 + $0x48] sm:$0xff]
  %v52 = vld [vmem:[%s1 + $0x50] sm:$0xff]
  %v53 = vld [vmem:[%s1 + $0x58] sm:$0xff]
  %v54 = vld [vmem:[%s1 + $0x60] sm:$0xff]
  %v55 = vld [vmem:[%s1 + $0x68] sm:$0xff]
  %v56 = vld [vmem:[%s1 + $0x70] sm:$0xff]
  %v57 = vld [vmem:[%s1 + $0x78] sm:$0xff]
  %v58 = vld [vmem:[%s1 + $0x80] sm:$0xff]
  %v59 = vld [vmem:[%s1 + $0x88] sm:$0xff]
  %v60 = vld [vmem:[%s1 + $0x90] sm:$0xff]
  %v61 = vld [vmem:[%s1 + $0x98] sm:$0xff]
  %v62 = vld [vmem:[%s1 + $0xa0] sm:$0xff]
  %v63 = vld [vmem:[%s1 + $0xa8] sm:$0xff]
  %v64 = vld [vmem:[%s1 + $0xb0] sm:$0xff]
  %v65 = vld [vmem:[%s1 + $0xb8] sm:$0xff]
  %v66 = vld [vmem:[%s1 + $0xc0] sm:$0xff]
  %v67 = vld [vmem:[%s1 + $0xc8] sm:$0xff]
  %v68 = vld [vmem:[%s1 + $0xd0] sm:$0xff]
  %v69 = vld [vmem:[%s1 + $0xd8] sm:$0xff]
  %v70 = vld [vmem:[%s1 + $0xe0] sm:$0xff]
  %v71 = vld [vmem:[%s1 + $0xe8] sm:$0xff]
  %v72 = vld [vmem:[%s1 + $0xf0] sm:$0xff]
  %v73 = vld [vmem:[%s1 + $0xf8] sm:$0xff]
  %v74 = vld [vmem:[%s1 + $0x100] sm:$0xff]
  %v75 = vld [vmem:[%s1 + $0x108] sm:$0xff]
  %v76 = vld [vmem:[%s1 + $0x110] sm:$0xff]
  %v77 = vld [vmem:[%s1 + $0x118] sm:$0xff]
  %v78 = vld [vmem:[%s1 + $0x120] sm:$0xff]
  %v79 = vld [vmem:[%s1 + $0x128] sm:$0xff]
  %v80 = vld [vmem:[%s1 + $0x130] sm:$0xff]
  %v81 = vld [vmem:[%s1 + $0x138] sm:$0xff]
  %v82 = vld [vmem:[%s1 + $0x140] sm:$0xff]
  %v83 = vld [vmem:[%s1 + $0x148] sm:$0xff]
  %v84 = vld [vmem:[%s1 + $0x150] sm:$0xff]
  %v85 = vld [vmem:[%s1 + $0x158] sm:$0xff]
  %v86 = vld [vmem:[%s1 + $0x160] sm:$0xff]
  %v87 = vld [vmem:[%s1 + $0x168] sm:$0xff]
  %v88 = vld [vmem:[%s1 + $0x170] sm:$0xff]
  %v89 = vld [vmem:[%s1 + $0x178] sm:$0xff]
  %v90 = vld [vmem:[%s1 + $0x180] sm:$0xff]
  %v91 = vld [vmem:[%s1 + $0x188] sm:$0xff]
  %v92 = vld [vmem:[%s1 + $0x190] sm:$0xff]
  %v93 = vld [vmem:[%s1 + $0x198] sm:$0xff]
  %v94 = vld [vmem:[%s1 + $0x1a0] sm:$0xff]
  %v95 = vld [vmem:[%s1 + $0x1a8] sm:$0xff]
  %v96 = vld [vmem:[%s1 + $0x1b0] sm:$0xff]
  %v97 = vld [vmem:[%s1 + $0x1b8] sm:$0xff]
  %v98 = vld [vmem:[%s1 + $0x1c0] sm:$0xff]
  %v99 = vld [vmem:[%s1 + $0x1c8] sm:$0xff]
  %v100 = vld [vmem:[%s1 + $0x1d0] sm:$0xff]
  %v101 = vld [vmem:[%s1 + $0x1d8] sm:$0xff]
  %v102 = vld [vmem:[%s1 + $0x1e0] sm:$0xff]
  %v103 = vld [vmem:[%s1 + $0x1e8] sm:$0xff]
  %v104 = vld [vmem:[%s1 + $0x1f0] sm:$0xff]
  %v105 = vld [vmem:[%s1 + $0x1f8] sm:$0xff]
  %v106 = vld [vmem:[%s1 + $0x200] sm:$0xff]
  %v107 = vld [vmem:[%s1 + $0x208] sm:$0xff]
  %v108 = vld [vmem:[%s1 + $0x210] sm:$0xff]
  %v109 = vld [vmem:[%s1 + $0x218] sm:$0xff]
  %v110 = vld [vmem:[%s1 + $0x220] sm:$0xff]
  %v111 = vld [vmem:[%s1 + $0x228] sm:$0xff]
  %v112 = vld [vmem:[%s1 + $0x230] sm:$0xff]
  %v113 = vld [vmem:[%s1 + $0x238] sm:$0xff]
  %v114 = vld [vmem:[%s1 + $0x240] sm:$0xff]
  %v115 = vld [vmem:[%s1 + $0x248] sm:$0xff]
  %v116 = vld [vmem:[%s1 + $0x250] sm:$0xff]
  %v117 = vld [vmem:[%s1 + $0x258] sm:$0xff]
  %v118 = vld [vmem:[%s1 + $0x260] sm:$0xff]
  %v119 = vld [vmem:[%s1 + $0x268] sm:$0xff]
  %v120 = vld [vmem:[%s1 + $0x270] sm:$0xff]
  %v121 = vld [vmem:[%s1 + $0x278] sm:$0xff]
  %v122 = vld [vmem:[%s1 + $0x280] sm:$0xff]
  %v123 = vld [vmem:[%s1 + $0x288] sm:$0xff]
  %v124 = vld [vmem:[%s1 + $0x290] sm:$0xff]
  %v125 = vld [vmem:[%s1 + $0x298] sm:$0xff]
  %v126 = vld [vmem:[%s1 + $0x2a0] sm:$0xff]
  %v127 = vld [vmem:[%s1 + $0x2a8] sm:$0xff]
  %v128 = vld [vmem:[%s1 + $0x2b0] sm:$0xff]
  %v129 = vld [vmem:[%s1 + $0x2b8] sm:$0xff]
  %v130 = vld [vmem:[%s1 + $0x2c0] sm:$0xff]
  %v131 = vld [vmem:[%s1 + $0x2c8] sm:$0xff]
  %v132 = vld [vmem:[%s1 + $0x2d0] sm:$0xff]
  %v133 = vld [vmem:[%s1 + $0x2d8] sm:$0xff]
  %v134 = vld [vmem:[%s1 + $0x2e0] sm:$0xff]
  %v135 = vld [vmem:[%s1 + $0x2e8] sm:$0xff]
  %v136 = vld [vmem:[%s1 + $0x2f0] sm:$0xff]
  %v137 = vld [vmem:[%s1 + $0x2f8] sm:$0xff]
  %v138 = vld [vmem:[%s1 + $0x300] sm:$0xff]
  %v139 = vld [vmem:[%s1 + $0x308] sm:$0xff]
  %v140 = vld [vmem:[%s1 + $0x310] sm:$0xff]
  %v141 = vld [vmem:[%s1 + $0x318] sm:$0xff]
  %v142 = vld [vmem:[%s1 + $0x320] sm:$0xff]
  %v143 = vld [vmem:[%s1 + $0x328] sm:$0xff]
  %v144 = vld [vmem:[%s1 + $0x330] sm:$0xff]
  %v145 = vld [vmem:[%s1 + $0x338] sm:$0xff]
  %v146 = vld [vmem:[%s1 + $0x340] sm:$0xff]
  %v147 = vld [vmem:[%s1 + $0x348] sm:$0xff]
  %v148 = vld [vmem:[%s1 + $0x350] sm:$0xff]
  %v149 = vld [vmem:[%s1 + $0x358] sm:$0xff]
  %v150 = vld [vmem:[%s1 + $0x360] sm:$0xff]
  %v151 = vld [vmem:[%s1 + $0x368] sm:$0xff]
  %v152 = vld [vmem:[%s1 + $0x370] sm:$0xff]
  %v153 = vld [vmem:[%s1 + $0x378] sm:$0xff]
  %v154 = vld [vmem:[%s1 + $0x380] sm:$0xff]
  %v155 = vld [vmem:[%s1 + $0x388] sm:$0xff]
  %v156 = vld [vmem:[%s1 + $0x390] sm:$0xff]
  %v157 = vld [vmem:[%s1 + $0x398] sm:$0xff]
  %v158 = vld [vmem:[%s1 + $0x3a0] sm:$0xff]
  %v159 = vld [vmem:[%s1 + $0x3a8] sm:$0xff]
  %v160 = vld [vmem:[%s1 + $0x3b0] sm:$0xff]
  %v161 = vld [vmem:[%s1 + $0x3b8] sm:$0xff]
  %v162 = vld [vmem:[%s1 + $0x3c0] sm:$0xff]
  %v163 = vld [vmem:[%s1 + $0x3c8] sm:$0xff]
  %v164 = vld [vmem:[%s1 + $0x3d0] sm:$0xff]
  %v165 = vld [vmem:[%s1 + $0x3d8] sm:$0xff]
  %v166 = vld [vmem:[%s1 + $0x3e0] sm:$0xff]
  %v167 = vld [vmem:[%s1 + $0x3e8] sm:$0xff]
  %v168 = vld [vmem:[%s1 + $0x3f0] sm:$0xff]
  %v169 = vld [vmem:[%s1 + $0x3f8] sm:$0xff]
  %v170 = vld [vmem:[%s1 + $0x400] sm:$0xff]
  %v171 = vld [vmem:[%s1 + $0x408] sm:$0xff]
  %v172 = vld [vmem:[%s1 + $0x410] sm:$0xff]
  %v173 = vld [vmem:[%s1 + $0x418] sm:$0xff]
  %v174 = vld [vmem:[%s1 + $0x420] sm:$0xff]
  %v175 = vld [vmem:[%s1 + $0x428] sm:$0xff]
  %v176 = vld [vmem:[%s1 + $0x430] sm:$0xff]
  %v177 = vld [vmem:[%s1 + $0x438] sm:$0xff]
  %v178 = vld [vmem:[%s1 + $0x440] sm:$0xff]
  %v179 = vld [vmem:[%s1 + $0x448] sm:$0xff]
  %v180 = vld [vmem:[%s1 + $0x450] sm:$0xff]
  %v181 = vld [vmem:[%s1 + $0x458] sm:$0xff]
  %v182 = vld [vmem:[%s1 + $0x460] sm:$0xff]
  %v183 = vld [vmem:[%s1 + $0x468] sm:$0xff]
  %v184 = vld [vmem:[%s1 + $0x470] sm:$0xff]
  %v185 = vld [vmem:[%s1 + $0x478] sm:$0xff]
  %v186 = vld [vmem:[%s1 + $0x480] sm:$0xff]
  %v187 = vld [vmem:[%s1 + $0x488] sm:$0xff]
  %v188 = vld [vmem:[%s1 + $0x490] sm:$0xff]
  %v189 = vld [vmem:[%s1 + $0x498] sm:$0xff]
  %v190 = vld [vmem:[%s1 + $0x4a0] sm:$0xff]
  %v191 = vld [vmem:[%s1 + $0x4a8] sm:$0xff]
  %v192 = vld [vmem:[%s1 + $0x4b0] sm:$0xff]
  %v193 = vld [vmem:[%s1 + $0x4b8] sm:$0xff]
  %v194 = vld [vmem:[%s1 + $0x4c0] sm:$0xff]
  %v195 = vld [vmem:[%s1 + $0x4c8] sm:$0xff]
  %v196 = vld [vmem:[%s1 + $0x4d0] sm:$0xff]
  %v197 = vld [vmem:[%s1 + $0x4d8] sm:$0xff]
  %v198 = vld [vmem:[%s1 + $0x4e0] sm:$0xff]
  %v199 = vld [vmem:[%s1 + $0x4e8] sm:$0xff]
  %v200 = vld [vmem:[%s1 + $0x4f0] sm:$0xff]
  %v201 = vld [vmem:[%s1 + $0x4f8] sm:$0xff]
  %v202 = vld [vmem:[%s1 + $0x500] sm:$0xff]
  %v203 = vld [vmem:[%s1 + $0x508] sm:$0xff]
  %v204 = vld [vmem:[%s1 + $0x510] sm:$0xff]
  %v205 = vld [vmem:[%s1 + $0x518] sm:$0xff]
  %v206 = vld [vmem:[%s1 + $0x520] sm:$0xff]
  %v207 = vld [vmem:[%s1 + $0x528] sm:$0xff]
  %v208 = vld [vmem:[%s1 + $0x530] sm:$0xff]
  %v209 = vld [vmem:[%s1 + $0x538] sm:$0xff]
  %v210 = vld [vmem:[%s1 + $0x540] sm:$0xff]
  %v211 = vld [vmem:[%s1 + $0x548] sm:$0xff]
  %v212 = vld [vmem:[%s1 + $0x550] sm:$0xff]
  %v213 = vld [vmem:[%s1 + $0x558] sm:$0xff]
  %v214 = vld [vmem:[%s1 + $0x560] sm:$0xff]
  %v215 = vld [vmem:[%s1 + $0x568] sm:$0xff]
  %v216 = vld [vmem:[%s1 + $0x570] sm:$0xff]
  %v217 = vld [vmem:[%s1 + $0x578] sm:$0xff]
  %v218 = vld [vmem:[%s1 + $0x580] sm:$0xff]
  %v219 = vld [vmem:[%s1 + $0x588] sm:$0xff]
  %v220 = vld [vmem:[%s1 + $0x590] sm:$0xff]
  %v221 = vld [vmem:[%s1 + $0x598] sm:$0xff]
  %v222 = vld [vmem:[%s1 + $0x5a0] sm:$0xff]
  %v223 = vld [vmem:[%s1 + $0x5a8] sm:$0xff]
  %v224 = vld [vmem:[%s1 + $0x5b0] sm:$0xff]
  %v225 = vld [vmem:[%s1 + $0x5b8] sm:$0xff]
  %v226 = vld [vmem:[%s1 + $0x5c0] sm:$0xff]
  %v227 = vld [vmem:[%s1 + $0x5c8] sm:$0xff]
  %v228 = vld [vmem:[%s1 + $0x5d0] sm:$0xff]
  %v229 = vld [vmem:[%s1 + $0x5d8] sm:$0xff]
  %v230 = vld [vmem:[%s1 + $0x5e0] sm:$0xff]
  %v231 = vld [vmem:[%s1 + $0x5e8] sm:$0xff]
  %v232 = vld [vmem:[%s1 + $0x5f0] sm:$0xff]
  %v233 = vld [vmem:[%s1 + $0x5f8] sm:$0xff]
  %v234 = vld [vmem:[%s2] sm:$0xf]
  %v236 = vlaneseq
  %v237 = vshrl.u32 %v236, 7
  %v238 = vsub.s32 0, %v237
  %v239 = vrot.slane %v234, %v238
  %v240 = vlaneseq
  %v241 = vshrl.u32 %v240, 7
  %v242 = vsub.s32 1, %v241
  %v243 = vrot.slane %v234, %v242
  %v244 = vlaneseq
  %v245 = vshrl.u32 %v244, 7
  %v246 = vsub.s32 2, %v245
  %v247 = vrot.slane %v234, %v246
  %v248 = vlaneseq
  %v249 = vshrl.u32 %v248, 7
  %v250 = vsub.s32 3, %v249
  %v251 = vrot.slane %v234, %v250
  %v262 = vunpack.c.l.b16 %v36
  %v263 = vunpack.c.h.b16 %v36
  %v264 = vunpack.c.l.b16 %v37
  %v265 = vunpack.c.h.b16 %v37
  %v266 = vunpack.c.l.b16 %v38
  %v267 = vunpack.c.h.b16 %v38
  %v268 = vunpack.c.l.b16 %v39
  %v269 = vunpack.c.h.b16 %v39
  %v270 = vunpack.c.l.b16 %v40
  %v271 = vunpack.c.h.b16 %v40
  %v272 = vunpack.c.l.b16 %v41
  %v273 = vunpack.c.h.b16 %v41
  %v274 = vpack.c.b16 %v268, %v262
  %v275 = vpack.c.b16 %v269, %v263
  %v276 = vpack.c.b16 %v270, %v264
  %v277 = vpack.c.b16 %v271, %v265
  %v278 = vpack.c.b16 %v272, %v266
  %v279 = vpack.c.b16 %v273, %v267
  %v478 = vunpack.c.l.b16 %v42
  %v479 = vunpack.c.h.b16 %v42
  %v480 = vunpack.c.l.b16 %v43
  %v481 = vunpack.c.h.b16 %v43
  %v482 = vunpack.c.l.b16 %v44
  %v483 = vunpack.c.h.b16 %v44
  %v484 = vunpack.c.l.b16 %v45
  %v485 = vunpack.c.h.b16 %v45
  %v486 = vunpack.c.l.b16 %v46
  %v487 = vunpack.c.h.b16 %v46
  %v488 = vunpack.c.l.b16 %v47
  %v489 = vunpack.c.h.b16 %v47
  %v490 = vunpack.c.l.b16 %v48
  %v491 = vunpack.c.h.b16 %v48
  %v492 = vunpack.c.l.b16 %v49
  %v493 = vunpack.c.h.b16 %v49
  %v494 = vunpack.c.l.b16 %v50
  %v495 = vunpack.c.h.b16 %v50
  %v496 = vunpack.c.l.b16 %v51
  %v497 = vunpack.c.h.b16 %v51
  %v498 = vunpack.c.l.b16 %v52
  %v499 = vunpack.c.h.b16 %v52
  %v500 = vunpack.c.l.b16 %v53
  %v501 = vunpack.c.h.b16 %v53
  %v502 = vunpack.c.l.b16 %v54
  %v503 = vunpack.c.h.b16 %v54
  %v504 = vunpack.c.l.b16 %v55
  %v505 = vunpack.c.h.b16 %v55
  %v506 = vunpack.c.l.b16 %v56
  %v507 = vunpack.c.h.b16 %v56
  %v508 = vunpack.c.l.b16 %v57
  %v509 = vunpack.c.h.b16 %v57
  %v510 = vunpack.c.l.b16 %v58
  %v511 = vunpack.c.h.b16 %v58
  %v512 = vunpack.c.l.b16 %v59
  %v513 = vunpack.c.h.b16 %v59
  %v514 = vunpack.c.l.b16 %v60
  %v515 = vunpack.c.h.b16 %v60
  %v516 = vunpack.c.l.b16 %v61
  %v517 = vunpack.c.h.b16 %v61
  %v518 = vunpack.c.l.b16 %v62
  %v519 = vunpack.c.h.b16 %v62
  %v520 = vunpack.c.l.b16 %v63
  %v521 = vunpack.c.h.b16 %v63
  %v522 = vunpack.c.l.b16 %v64
  %v523 = vunpack.c.h.b16 %v64
  %v524 = vunpack.c.l.b16 %v65
  %v525 = vunpack.c.h.b16 %v65
  %v526 = vunpack.c.l.b16 %v66
  %v527 = vunpack.c.h.b16 %v66
  %v528 = vunpack.c.l.b16 %v67
  %v529 = vunpack.c.h.b16 %v67
  %v530 = vunpack.c.l.b16 %v68
  %v531 = vunpack.c.h.b16 %v68
  %v532 = vunpack.c.l.b16 %v69
  %v533 = vunpack.c.h.b16 %v69
  %v534 = vunpack.c.l.b16 %v70
  %v535 = vunpack.c.h.b16 %v70
  %v536 = vunpack.c.l.b16 %v71
  %v537 = vunpack.c.h.b16 %v71
  %v538 = vunpack.c.l.b16 %v72
  %v539 = vunpack.c.h.b16 %v72
  %v540 = vunpack.c.l.b16 %v73
  %v541 = vunpack.c.h.b16 %v73
  %v542 = vunpack.c.l.b16 %v74
  %v543 = vunpack.c.h.b16 %v74
  %v544 = vunpack.c.l.b16 %v75
  %v545 = vunpack.c.h.b16 %v75
  %v546 = vunpack.c.l.b16 %v76
  %v547 = vunpack.c.h.b16 %v76
  %v548 = vunpack.c.l.b16 %v77
  %v549 = vunpack.c.h.b16 %v77
  %v550 = vunpack.c.l.b16 %v78
  %v551 = vunpack.c.h.b16 %v78
  %v552 = vunpack.c.l.b16 %v79
  %v553 = vunpack.c.h.b16 %v79
  %v554 = vunpack.c.l.b16 %v80
  %v555 = vunpack.c.h.b16 %v80
  %v556 = vunpack.c.l.b16 %v81
  %v557 = vunpack.c.h.b16 %v81
  %v558 = vunpack.c.l.b16 %v82
  %v559 = vunpack.c.h.b16 %v82
  %v560 = vunpack.c.l.b16 %v83
  %v561 = vunpack.c.h.b16 %v83
  %v562 = vunpack.c.l.b16 %v84
  %v563 = vunpack.c.h.b16 %v84
  %v564 = vunpack.c.l.b16 %v85
  %v565 = vunpack.c.h.b16 %v85
  %v566 = vunpack.c.l.b16 %v86
  %v567 = vunpack.c.h.b16 %v86
  %v568 = vunpack.c.l.b16 %v87
  %v569 = vunpack.c.h.b16 %v87
  %v570 = vunpack.c.l.b16 %v88
  %v571 = vunpack.c.h.b16 %v88
  %v572 = vunpack.c.l.b16 %v89
  %v573 = vunpack.c.h.b16 %v89
  %v574 = vunpack.c.l.b16 %v90
  %v575 = vunpack.c.h.b16 %v90
  %v576 = vunpack.c.l.b16 %v91
  %v577 = vunpack.c.h.b16 %v91
  %v578 = vunpack.c.l.b16 %v92
  %v579 = vunpack.c.h.b16 %v92
  %v580 = vunpack.c.l.b16 %v93
  %v581 = vunpack.c.h.b16 %v93
  %v582 = vunpack.c.l.b16 %v94
  %v583 = vunpack.c.h.b16 %v94
  %v584 = vunpack.c.l.b16 %v95
  %v585 = vunpack.c.h.b16 %v95
  %v586 = vunpack.c.l.b16 %v96
  %v587 = vunpack.c.h.b16 %v96
  %v588 = vunpack.c.l.b16 %v97
  %v589 = vunpack.c.h.b16 %v97
  %v590 = vunpack.c.l.b16 %v98
  %v591 = vunpack.c.h.b16 %v98
  %v592 = vunpack.c.l.b16 %v99
  %v593 = vunpack.c.h.b16 %v99
  %v594 = vunpack.c.l.b16 %v100
  %v595 = vunpack.c.h.b16 %v100
  %v596 = vunpack.c.l.b16 %v101
  %v597 = vunpack.c.h.b16 %v101
  %v598 = vunpack.c.l.b16 %v102
  %v599 = vunpack.c.h.b16 %v102
  %v600 = vunpack.c.l.b16 %v103
  %v601 = vunpack.c.h.b16 %v103
  %v602 = vunpack.c.l.b16 %v104
  %v603 = vunpack.c.h.b16 %v104
  %v604 = vunpack.c.l.b16 %v105
  %v605 = vunpack.c.h.b16 %v105
  %v606 = vunpack.c.l.b16 %v106
  %v607 = vunpack.c.h.b16 %v106
  %v608 = vunpack.c.l.b16 %v107
  %v609 = vunpack.c.h.b16 %v107
  %v610 = vunpack.c.l.b16 %v108
  %v611 = vunpack.c.h.b16 %v108
  %v612 = vunpack.c.l.b16 %v109
  %v613 = vunpack.c.h.b16 %v109
  %v614 = vunpack.c.l.b16 %v110
  %v615 = vunpack.c.h.b16 %v110
  %v616 = vunpack.c.l.b16 %v111
  %v617 = vunpack.c.h.b16 %v111
  %v618 = vunpack.c.l.b16 %v112
  %v619 = vunpack.c.h.b16 %v112
  %v620 = vunpack.c.l.b16 %v113
  %v621 = vunpack.c.h.b16 %v113
  %v622 = vunpack.c.l.b16 %v114
  %v623 = vunpack.c.h.b16 %v114
  %v624 = vunpack.c.l.b16 %v115
  %v625 = vunpack.c.h.b16 %v115
  %v626 = vunpack.c.l.b16 %v116
  %v627 = vunpack.c.h.b16 %v116
  %v628 = vunpack.c.l.b16 %v117
  %v629 = vunpack.c.h.b16 %v117
  %v630 = vunpack.c.l.b16 %v118
  %v631 = vunpack.c.h.b16 %v118
  %v632 = vunpack.c.l.b16 %v119
  %v633 = vunpack.c.h.b16 %v119
  %v634 = vunpack.c.l.b16 %v120
  %v635 = vunpack.c.h.b16 %v120
  %v636 = vunpack.c.l.b16 %v121
  %v637 = vunpack.c.h.b16 %v121
  %v638 = vunpack.c.l.b16 %v122
  %v639 = vunpack.c.h.b16 %v122
  %v640 = vunpack.c.l.b16 %v123
  %v641 = vunpack.c.h.b16 %v123
  %v642 = vunpack.c.l.b16 %v124
  %v643 = vunpack.c.h.b16 %v124
  %v644 = vunpack.c.l.b16 %v125
  %v645 = vunpack.c.h.b16 %v125
  %v646 = vunpack.c.l.b16 %v126
  %v647 = vunpack.c.h.b16 %v126
  %v648 = vunpack.c.l.b16 %v127
  %v649 = vunpack.c.h.b16 %v127
  %v650 = vunpack.c.l.b16 %v128
  %v651 = vunpack.c.h.b16 %v128
  %v652 = vunpack.c.l.b16 %v129
  %v653 = vunpack.c.h.b16 %v129
  %v654 = vunpack.c.l.b16 %v130
  %v655 = vunpack.c.h.b16 %v130
  %v656 = vunpack.c.l.b16 %v131
  %v657 = vunpack.c.h.b16 %v131
  %v658 = vunpack.c.l.b16 %v132
  %v659 = vunpack.c.h.b16 %v132
  %v660 = vunpack.c.l.b16 %v133
  %v661 = vunpack.c.h.b16 %v133
  %v662 = vunpack.c.l.b16 %v134
  %v663 = vunpack.c.h.b16 %v134
  %v664 = vunpack.c.l.b16 %v135
  %v665 = vunpack.c.h.b16 %v135
  %v666 = vunpack.c.l.b16 %v136
  %v667 = vunpack.c.h.b16 %v136
  %v668 = vunpack.c.l.b16 %v137
  %v669 = vunpack.c.h.b16 %v137
  %v670 = vunpack.c.l.b16 %v138
  %v671 = vunpack.c.h.b16 %v138
  %v672 = vunpack.c.l.b16 %v139
  %v673 = vunpack.c.h.b16 %v139
  %v674 = vunpack.c.l.b16 %v140
  %v675 = vunpack.c.h.b16 %v140
  %v676 = vunpack.c.l.b16 %v141
  %v677 = vunpack.c.h.b16 %v141
  %v678 = vunpack.c.l.b16 %v142
  %v679 = vunpack.c.h.b16 %v142
  %v680 = vunpack.c.l.b16 %v143
  %v681 = vunpack.c.h.b16 %v143
  %v682 = vunpack.c.l.b16 %v144
  %v683 = vunpack.c.h.b16 %v144
  %v684 = vunpack.c.l.b16 %v145
  %v685 = vunpack.c.h.b16 %v145
  %v686 = vunpack.c.l.b16 %v146
  %v687 = vunpack.c.h.b16 %v146
  %v688 = vunpack.c.l.b16 %v147
  %v689 = vunpack.c.h.b16 %v147
  %v690 = vunpack.c.l.b16 %v148
  %v691 = vunpack.c.h.b16 %v148
  %v692 = vunpack.c.l.b16 %v149
  %v693 = vunpack.c.h.b16 %v149
  %v694 = vunpack.c.l.b16 %v150
  %v695 = vunpack.c.h.b16 %v150
  %v696 = vunpack.c.l.b16 %v151
  %v697 = vunpack.c.h.b16 %v151
  %v698 = vunpack.c.l.b16 %v152
  %v699 = vunpack.c.h.b16 %v152
  %v700 = vunpack.c.l.b16 %v153
  %v701 = vunpack.c.h.b16 %v153
  %v702 = vunpack.c.l.b16 %v154
  %v703 = vunpack.c.h.b16 %v154
  %v704 = vunpack.c.l.b16 %v155
  %v705 = vunpack.c.h.b16 %v155
  %v706 = vunpack.c.l.b16 %v156
  %v707 = vunpack.c.h.b16 %v156
  %v708 = vunpack.c.l.b16 %v157
  %v709 = vunpack.c.h.b16 %v157
  %v710 = vunpack.c.l.b16 %v158
  %v711 = vunpack.c.h.b16 %v158
  %v712 = vunpack.c.l.b16 %v159
  %v713 = vunpack.c.h.b16 %v159
  %v714 = vunpack.c.l.b16 %v160
  %v715 = vunpack.c.h.b16 %v160
  %v716 = vunpack.c.l.b16 %v161
  %v717 = vunpack.c.h.b16 %v161
  %v718 = vunpack.c.l.b16 %v162
  %v719 = vunpack.c.h.b16 %v162
  %v720 = vunpack.c.l.b16 %v163
  %v721 = vunpack.c.h.b16 %v163
  %v722 = vunpack.c.l.b16 %v164
  %v723 = vunpack.c.h.b16 %v164
  %v724 = vunpack.c.l.b16 %v165
  %v725 = vunpack.c.h.b16 %v165
  %v726 = vunpack.c.l.b16 %v166
  %v727 = vunpack.c.h.b16 %v166
  %v728 = vunpack.c.l.b16 %v167
  %v729 = vunpack.c.h.b16 %v167
  %v730 = vunpack.c.l.b16 %v168
  %v731 = vunpack.c.h.b16 %v168
  %v732 = vunpack.c.l.b16 %v169
  %v733 = vunpack.c.h.b16 %v169
  %v734 = vunpack.c.l.b16 %v170
  %v735 = vunpack.c.h.b16 %v170
  %v736 = vunpack.c.l.b16 %v171
  %v737 = vunpack.c.h.b16 %v171
  %v738 = vunpack.c.l.b16 %v172
  %v739 = vunpack.c.h.b16 %v172
  %v740 = vunpack.c.l.b16 %v173
  %v741 = vunpack.c.h.b16 %v173
  %v742 = vunpack.c.l.b16 %v174
  %v743 = vunpack.c.h.b16 %v174
  %v744 = vunpack.c.l.b16 %v175
  %v745 = vunpack.c.h.b16 %v175
  %v746 = vunpack.c.l.b16 %v176
  %v747 = vunpack.c.h.b16 %v176
  %v748 = vunpack.c.l.b16 %v177
  %v749 = vunpack.c.h.b16 %v177
  %v750 = vunpack.c.l.b16 %v178
  %v751 = vunpack.c.h.b16 %v178
  %v752 = vunpack.c.l.b16 %v179
  %v753 = vunpack.c.h.b16 %v179
  %v754 = vunpack.c.l.b16 %v180
  %v755 = vunpack.c.h.b16 %v180
  %v756 = vunpack.c.l.b16 %v181
  %v757 = vunpack.c.h.b16 %v181
  %v758 = vunpack.c.l.b16 %v182
  %v759 = vunpack.c.h.b16 %v182
  %v760 = vunpack.c.l.b16 %v183
  %v761 = vunpack.c.h.b16 %v183
  %v762 = vunpack.c.l.b16 %v184
  %v763 = vunpack.c.h.b16 %v184
  %v764 = vunpack.c.l.b16 %v185
  %v765 = vunpack.c.h.b16 %v185
  %v766 = vunpack.c.l.b16 %v186
  %v767 = vunpack.c.h.b16 %v186
  %v768 = vunpack.c.l.b16 %v187
  %v769 = vunpack.c.h.b16 %v187
  %v770 = vunpack.c.l.b16 %v188
  %v771 = vunpack.c.h.b16 %v188
  %v772 = vunpack.c.l.b16 %v189
  %v773 = vunpack.c.h.b16 %v189
  %v774 = vunpack.c.l.b16 %v190
  %v775 = vunpack.c.h.b16 %v190
  %v776 = vunpack.c.l.b16 %v191
  %v777 = vunpack.c.h.b16 %v191
  %v778 = vunpack.c.l.b16 %v192
  %v779 = vunpack.c.h.b16 %v192
  %v780 = vunpack.c.l.b16 %v193
  %v781 = vunpack.c.h.b16 %v193
  %v782 = vunpack.c.l.b16 %v194
  %v783 = vunpack.c.h.b16 %v194
  %v784 = vunpack.c.l.b16 %v195
  %v785 = vunpack.c.h.b16 %v195
  %v786 = vunpack.c.l.b16 %v196
  %v787 = vunpack.c.h.b16 %v196
  %v788 = vunpack.c.l.b16 %v197
  %v789 = vunpack.c.h.b16 %v197
  %v790 = vunpack.c.l.b16 %v198
  %v791 = vunpack.c.h.b16 %v198
  %v792 = vunpack.c.l.b16 %v199
  %v793 = vunpack.c.h.b16 %v199
  %v794 = vunpack.c.l.b16 %v200
  %v795 = vunpack.c.h.b16 %v200
  %v796 = vunpack.c.l.b16 %v201
  %v797 = vunpack.c.h.b16 %v201
  %v798 = vunpack.c.l.b16 %v202
  %v799 = vunpack.c.h.b16 %v202
  %v800 = vunpack.c.l.b16 %v203
  %v801 = vunpack.c.h.b16 %v203
  %v802 = vunpack.c.l.b16 %v204
  %v803 = vunpack.c.h.b16 %v204
  %v804 = vunpack.c.l.b16 %v205
  %v805 = vunpack.c.h.b16 %v205
  %v806 = vunpack.c.l.b16 %v206
  %v807 = vunpack.c.h.b16 %v206
  %v808 = vunpack.c.l.b16 %v207
  %v809 = vunpack.c.h.b16 %v207
  %v810 = vunpack.c.l.b16 %v208
  %v811 = vunpack.c.h.b16 %v208
  %v812 = vunpack.c.l.b16 %v209
  %v813 = vunpack.c.h.b16 %v209
  %v814 = vunpack.c.l.b16 %v210
  %v815 = vunpack.c.h.b16 %v210
  %v816 = vunpack.c.l.b16 %v211
  %v817 = vunpack.c.h.b16 %v211
  %v818 = vunpack.c.l.b16 %v212
  %v819 = vunpack.c.h.b16 %v212
  %v820 = vunpack.c.l.b16 %v213
  %v821 = vunpack.c.h.b16 %v213
  %v822 = vunpack.c.l.b16 %v214
  %v823 = vunpack.c.h.b16 %v214
  %v824 = vunpack.c.l.b16 %v215
  %v825 = vunpack.c.h.b16 %v215
  %v826 = vunpack.c.l.b16 %v216
  %v827 = vunpack.c.h.b16 %v216
  %v828 = vunpack.c.l.b16 %v217
  %v829 = vunpack.c.h.b16 %v217
  %v830 = vunpack.c.l.b16 %v218
  %v831 = vunpack.c.h.b16 %v218
  %v832 = vunpack.c.l.b16 %v219
  %v833 = vunpack.c.h.b16 %v219
  %v834 = vunpack.c.l.b16 %v220
  %v835 = vunpack.c.h.b16 %v220
  %v836 = vunpack.c.l.b16 %v221
  %v837 = vunpack.c.h.b16 %v221
  %v838 = vunpack.c.l.b16 %v222
  %v839 = vunpack.c.h.b16 %v222
  %v840 = vunpack.c.l.b16 %v223
  %v841 = vunpack.c.h.b16 %v223
  %v842 = vunpack.c.l.b16 %v224
  %v843 = vunpack.c.h.b16 %v224
  %v844 = vunpack.c.l.b16 %v225
  %v845 = vunpack.c.h.b16 %v225
  %v846 = vunpack.c.l.b16 %v226
  %v847 = vunpack.c.h.b16 %v226
  %v848 = vunpack.c.l.b16 %v227
  %v849 = vunpack.c.h.b16 %v227
  %v850 = vunpack.c.l.b16 %v228
  %v851 = vunpack.c.h.b16 %v228
  %v852 = vunpack.c.l.b16 %v229
  %v853 = vunpack.c.h.b16 %v229
  %v854 = vunpack.c.l.b16 %v230
  %v855 = vunpack.c.h.b16 %v230
  %v856 = vunpack.c.l.b16 %v231
  %v857 = vunpack.c.h.b16 %v231
  %v858 = vunpack.c.l.b16 %v232
  %v859 = vunpack.c.h.b16 %v232
  %v860 = vunpack.c.l.b16 %v233
  %v861 = vunpack.c.h.b16 %v233
  %v862 = vpack.c.b16 %v482, %v478
  %v863 = vpack.c.b16 %v483, %v479
  %v864 = vpack.c.b16 %v484, %v480
  %v865 = vpack.c.b16 %v485, %v481
  %v866 = vpack.c.b16 %v490, %v486
  %v867 = vpack.c.b16 %v491, %v487
  %v868 = vpack.c.b16 %v492, %v488
  %v869 = vpack.c.b16 %v493, %v489
  %v870 = vpack.c.b16 %v498, %v494
  %v871 = vpack.c.b16 %v499, %v495
  %v872 = vpack.c.b16 %v500, %v496
  %v873 = vpack.c.b16 %v501, %v497
  %v874 = vpack.c.b16 %v506, %v502
  %v875 = vpack.c.b16 %v507, %v503
  %v876 = vpack.c.b16 %v508, %v504
  %v877 = vpack.c.b16 %v509, %v505
  %v878 = vpack.c.b16 %v514, %v510
  %v879 = vpack.c.b16 %v515, %v511
  %v880 = vpack.c.b16 %v516, %v512
  %v881 = vpack.c.b16 %v517, %v513
  %v882 = vpack.c.b16 %v522, %v518
  %v883 = vpack.c.b16 %v523, %v519
  %v884 = vpack.c.b16 %v524, %v520
  %v885 = vpack.c.b16 %v525, %v521
  %v886 = vpack.c.b16 %v530, %v526
  %v887 = vpack.c.b16 %v531, %v527
  %v888 = vpack.c.b16 %v532, %v528
  %v889 = vpack.c.b16 %v533, %v529
  %v890 = vpack.c.b16 %v538, %v534
  %v891 = vpack.c.b16 %v539, %v535
  %v892 = vpack.c.b16 %v540, %v536
  %v893 = vpack.c.b16 %v541, %v537
  %v894 = vpack.c.b16 %v546, %v542
  %v895 = vpack.c.b16 %v547, %v543
  %v896 = vpack.c.b16 %v548, %v544
  %v897 = vpack.c.b16 %v549, %v545
  %v898 = vpack.c.b16 %v554, %v550
  %v899 = vpack.c.b16 %v555, %v551
  %v900 = vpack.c.b16 %v556, %v552
  %v901 = vpack.c.b16 %v557, %v553
  %v902 = vpack.c.b16 %v562, %v558
  %v903 = vpack.c.b16 %v563, %v559
  %v904 = vpack.c.b16 %v564, %v560
  %v905 = vpack.c.b16 %v565, %v561
  %v906 = vpack.c.b16 %v570, %v566
  %v907 = vpack.c.b16 %v571, %v567
  %v908 = vpack.c.b16 %v572, %v568
  %v909 = vpack.c.b16 %v573, %v569
  %v910 = vpack.c.b16 %v578, %v574
  %v911 = vpack.c.b16 %v579, %v575
  %v912 = vpack.c.b16 %v580, %v576
  %v913 = vpack.c.b16 %v581, %v577
  %v914 = vpack.c.b16 %v586, %v582
  %v915 = vpack.c.b16 %v587, %v583
  %v916 = vpack.c.b16 %v588, %v584
  %v917 = vpack.c.b16 %v589, %v585
  %v918 = vpack.c.b16 %v594, %v590
  %v919 = vpack.c.b16 %v595, %v591
  %v920 = vpack.c.b16 %v596, %v592
  %v921 = vpack.c.b16 %v597, %v593
  %v922 = vpack.c.b16 %v602, %v598
  %v923 = vpack.c.b16 %v603, %v599
  %v924 = vpack.c.b16 %v604, %v600
  %v925 = vpack.c.b16 %v605, %v601
  %v926 = vpack.c.b16 %v610, %v606
  %v927 = vpack.c.b16 %v611, %v607
  %v928 = vpack.c.b16 %v612, %v608
  %v929 = vpack.c.b16 %v613, %v609
  %v930 = vpack.c.b16 %v618, %v614
  %v931 = vpack.c.b16 %v619, %v615
  %v932 = vpack.c.b16 %v620, %v616
  %v933 = vpack.c.b16 %v621, %v617
  %v934 = vpack.c.b16 %v626, %v622
  %v935 = vpack.c.b16 %v627, %v623
  %v936 = vpack.c.b16 %v628, %v624
  %v937 = vpack.c.b16 %v629, %v625
  %v938 = vpack.c.b16 %v634, %v630
  %v939 = vpack.c.b16 %v635, %v631
  %v940 = vpack.c.b16 %v636, %v632
  %v941 = vpack.c.b16 %v637, %v633
  %v942 = vpack.c.b16 %v642, %v638
  %v943 = vpack.c.b16 %v643, %v639
  %v944 = vpack.c.b16 %v644, %v640
  %v945 = vpack.c.b16 %v645, %v641
  %v946 = vpack.c.b16 %v650, %v646
  %v947 = vpack.c.b16 %v651, %v647
  %v948 = vpack.c.b16 %v652, %v648
  %v949 = vpack.c.b16 %v653, %v649
  %v950 = vpack.c.b16 %v658, %v654
  %v951 = vpack.c.b16 %v659, %v655
  %v952 = vpack.c.b16 %v660, %v656
  %v953 = vpack.c.b16 %v661, %v657
  %v954 = vpack.c.b16 %v666, %v662
  %v955 = vpack.c.b16 %v667, %v663
  %v956 = vpack.c.b16 %v668, %v664
  %v957 = vpack.c.b16 %v669, %v665
  %v958 = vpack.c.b16 %v674, %v670
  %v959 = vpack.c.b16 %v675, %v671
  %v960 = vpack.c.b16 %v676, %v672
  %v961 = vpack.c.b16 %v677, %v673
  %v962 = vpack.c.b16 %v682, %v678
  %v963 = vpack.c.b16 %v683, %v679
  %v964 = vpack.c.b16 %v684, %v680
  %v965 = vpack.c.b16 %v685, %v681
  %v966 = vpack.c.b16 %v690, %v686
  %v967 = vpack.c.b16 %v691, %v687
  %v968 = vpack.c.b16 %v692, %v688
  %v969 = vpack.c.b16 %v693, %v689
  %v970 = vpack.c.b16 %v698, %v694
  %v971 = vpack.c.b16 %v699, %v695
  %v972 = vpack.c.b16 %v700, %v696
  %v973 = vpack.c.b16 %v701, %v697
  %v974 = vpack.c.b16 %v706, %v702
  %v975 = vpack.c.b16 %v707, %v703
  %v976 = vpack.c.b16 %v708, %v704
  %v977 = vpack.c.b16 %v709, %v705
  %v978 = vpack.c.b16 %v714, %v710
  %v979 = vpack.c.b16 %v715, %v711
  %v980 = vpack.c.b16 %v716, %v712
  %v981 = vpack.c.b16 %v717, %v713
  %v982 = vpack.c.b16 %v722, %v718
  %v983 = vpack.c.b16 %v723, %v719
  %v984 = vpack.c.b16 %v724, %v720
  %v985 = vpack.c.b16 %v725, %v721
  %v986 = vpack.c.b16 %v730, %v726
  %v987 = vpack.c.b16 %v731, %v727
  %v988 = vpack.c.b16 %v732, %v728
  %v989 = vpack.c.b16 %v733, %v729
  %v990 = vpack.c.b16 %v738, %v734
  %v991 = vpack.c.b16 %v739, %v735
  %v992 = vpack.c.b16 %v740, %v736
  %v993 = vpack.c.b16 %v741, %v737
  %v994 = vpack.c.b16 %v746, %v742
  %v995 = vpack.c.b16 %v747, %v743
  %v996 = vpack.c.b16 %v748, %v744
  %v997 = vpack.c.b16 %v749, %v745
  %v998 = vpack.c.b16 %v754, %v750
  %v999 = vpack.c.b16 %v755, %v751
  %v1000 = vpack.c.b16 %v756, %v752
  %v1001 = vpack.c.b16 %v757, %v753
  %v1002 = vpack.c.b16 %v762, %v758
  %v1003 = vpack.c.b16 %v763, %v759
  %v1004 = vpack.c.b16 %v764, %v760
  %v1005 = vpack.c.b16 %v765, %v761
  %v1006 = vpack.c.b16 %v770, %v766
  %v1007 = vpack.c.b16 %v771, %v767
  %v1008 = vpack.c.b16 %v772, %v768
  %v1009 = vpack.c.b16 %v773, %v769
  %v1010 = vpack.c.b16 %v778, %v774
  %v1011 = vpack.c.b16 %v779, %v775
  %v1012 = vpack.c.b16 %v780, %v776
  %v1013 = vpack.c.b16 %v781, %v777
  %v1014 = vpack.c.b16 %v786, %v782
  %v1015 = vpack.c.b16 %v787, %v783
  %v1016 = vpack.c.b16 %v788, %v784
  %v1017 = vpack.c.b16 %v789, %v785
  %v1018 = vpack.c.b16 %v794, %v790
  %v1019 = vpack.c.b16 %v795, %v791
  %v1020 = vpack.c.b16 %v796, %v792
  %v1021 = vpack.c.b16 %v797, %v793
  %v1022 = vpack.c.b16 %v802, %v798
  %v1023 = vpack.c.b16 %v803, %v799
  %v1024 = vpack.c.b16 %v804, %v800
  %v1025 = vpack.c.b16 %v805, %v801
  %v1026 = vpack.c.b16 %v810, %v806
  %v1027 = vpack.c.b16 %v811, %v807
  %v1028 = vpack.c.b16 %v812, %v808
  %v1029 = vpack.c.b16 %v813, %v809
  %v1030 = vpack.c.b16 %v818, %v814
  %v1031 = vpack.c.b16 %v819, %v815
  %v1032 = vpack.c.b16 %v820, %v816
  %v1033 = vpack.c.b16 %v821, %v817
  %v1034 = vpack.c.b16 %v826, %v822
  %v1035 = vpack.c.b16 %v827, %v823
  %v1036 = vpack.c.b16 %v828, %v824
  %v1037 = vpack.c.b16 %v829, %v825
  %v1038 = vpack.c.b16 %v834, %v830
  %v1039 = vpack.c.b16 %v835, %v831
  %v1040 = vpack.c.b16 %v836, %v832
  %v1041 = vpack.c.b16 %v837, %v833
  %v1042 = vpack.c.b16 %v842, %v838
  %v1043 = vpack.c.b16 %v843, %v839
  %v1044 = vpack.c.b16 %v844, %v840
  %v1045 = vpack.c.b16 %v845, %v841
  %v1046 = vpack.c.b16 %v850, %v846
  %v1047 = vpack.c.b16 %v851, %v847
  %v1048 = vpack.c.b16 %v852, %v848
  %v1049 = vpack.c.b16 %v853, %v849
  %v1050 = vpack.c.b16 %v858, %v854
  %v1051 = vpack.c.b16 %v859, %v855
  %v1052 = vpack.c.b16 %v860, %v856
  %v1053 = vpack.c.b16 %v861, %v857
  %1246 = vmatprep.subr.bf16.mxu0 %v891
  %1247 = vmatpush1.bf16.msra.mxu0 %v890
  %1248 = vmatprep.subr.bf16.mxu0 %v887
  %1249 = vmatpush1.bf16.msra.mxu0 %v886
  %1250 = vmatprep.subr.bf16.mxu0 %v883
  %1251 = vmatpush1.bf16.msra.mxu0 %v882
  %1252 = vmatprep.subr.bf16.mxu0 %v879
  %1253 = vmatpush1.bf16.msra.mxu0 %v878
  %1254 = vmatprep.subr.bf16.mxu0 %v875
  %1255 = vmatpush1.bf16.msra.mxu0 %v874
  %1256 = vmatprep.subr.bf16.mxu0 %v871
  %1257 = vmatpush1.bf16.msra.mxu0 %v870
  %1258 = vmatprep.subr.bf16.mxu0 %v867
  %1259 = vmatpush1.bf16.msra.mxu0 %v866
  %1260 = vmatprep.subr.bf16.mxu0 %v863
  %1261 = vmatpush1.bf16.msra.mxu0 %v862
  %1262 = vmatprep.subr.bf16.mxu0 %v923
  %1263 = vmatpush2.bf16.msra.mxu0 %v922
  %1264 = vmatprep.subr.bf16.mxu0 %v919
  %1265 = vmatpush2.bf16.msra.mxu0 %v918
  %1266 = vmatprep.subr.bf16.mxu0 %v915
  %1267 = vmatpush2.bf16.msra.mxu0 %v914
  %1268 = vmatprep.subr.bf16.mxu0 %v911
  %1269 = vmatpush2.bf16.msra.mxu0 %v910
  %1270 = vmatprep.subr.bf16.mxu0 %v907
  %1271 = vmatpush2.bf16.msra.mxu0 %v906
  %1272 = vmatprep.subr.bf16.mxu0 %v903
  %1273 = vmatpush2.bf16.msra.mxu0 %v902
  %1274 = vmatprep.subr.bf16.mxu0 %v899
  %1275 = vmatpush2.bf16.msra.mxu0 %v898
  %1276 = vmatprep.subr.bf16.mxu0 %v895
  %1277 = vmatpush2.bf16.msra.mxu0 %v894
  %1278 = vmatprep.mubr.bf16.mxu0 %v275
  %1279 = vmatmul.mubr.bf16.gmra.mxu0 %v274
  %v1280 = vpop.f32.mrf.mxu0
  %v1281 = vadd.f32 %v239, %v1280
  %v1282 = vpop.f32.mrf.mxu0
  %v1283 = vadd.f32 %v243, %v1282
  %v1284 = vpop.f32.mrf.mxu0
  %v1285 = vadd.f32 %v239, %v1284
  %v1286 = vpop.f32.mrf.mxu0
  %v1287 = vadd.f32 %v243, %v1286
  %1288 = vdwg.mxu0
  %1289 = vmatprep.subr.bf16.mxu0 %v955
  %1290 = vmatpush1.bf16.msra.mxu0 %v954
  %1291 = vmatprep.subr.bf16.mxu0 %v951
  %1292 = vmatpush1.bf16.msra.mxu0 %v950
  %1293 = vmatprep.subr.bf16.mxu0 %v947
  %1294 = vmatpush1.bf16.msra.mxu0 %v946
  %1295 = vmatprep.subr.bf16.mxu0 %v943
  %1296 = vmatpush1.bf16.msra.mxu0 %v942
  %1297 = vmatprep.subr.bf16.mxu0 %v939
  %1298 = vmatpush1.bf16.msra.mxu0 %v938
  %1299 = vmatprep.subr.bf16.mxu0 %v935
  %1300 = vmatpush1.bf16.msra.mxu0 %v934
  %1301 = vmatprep.subr.bf16.mxu0 %v931
  %1302 = vmatpush1.bf16.msra.mxu0 %v930
  %1303 = vmatprep.subr.bf16.mxu0 %v927
  %1304 = vmatpush1.bf16.msra.mxu0 %v926
  %1305 = vmatprep.subr.bf16.mxu0 %v987
  %1306 = vmatpush2.bf16.msra.mxu0 %v986
  %1307 = vmatprep.subr.bf16.mxu0 %v983
  %1308 = vmatpush2.bf16.msra.mxu0 %v982
  %1309 = vmatprep.subr.bf16.mxu0 %v979
  %1310 = vmatpush2.bf16.msra.mxu0 %v978
  %1311 = vmatprep.subr.bf16.mxu0 %v975
  %1312 = vmatpush2.bf16.msra.mxu0 %v974
  %1313 = vmatprep.subr.bf16.mxu0 %v971
  %1314 = vmatpush2.bf16.msra.mxu0 %v970
  %1315 = vmatprep.subr.bf16.mxu0 %v967
  %1316 = vmatpush2.bf16.msra.mxu0 %v966
  %1317 = vmatprep.subr.bf16.mxu0 %v963
  %1318 = vmatpush2.bf16.msra.mxu0 %v962
  %1319 = vmatprep.subr.bf16.mxu0 %v959
  %1320 = vmatpush2.bf16.msra.mxu0 %v958
  %1321 = vmatprep.mubr.bf16.mxu0 %v277
  %1322 = vmatmul.mubr.bf16.gmra.mxu0 %v276
  %v1323 = vpop.f32.mrf.mxu0
  %v1324 = vadd.f32 %v1281, %v1323
  %v1325 = vpop.f32.mrf.mxu0
  %v1326 = vadd.f32 %v1283, %v1325
  %v1327 = vpop.f32.mrf.mxu0
  %v1328 = vadd.f32 %v1285, %v1327
  %v1329 = vpop.f32.mrf.mxu0
  %v1330 = vadd.f32 %v1287, %v1329
  %1331 = vdwg.mxu0
  %1332 = vmatprep.subr.bf16.mxu0 %v1019
  %1333 = vmatpush1.bf16.msra.mxu0 %v1018
  %1334 = vmatprep.subr.bf16.mxu0 %v1015
  %1335 = vmatpush1.bf16.msra.mxu0 %v1014
  %1336 = vmatprep.subr.bf16.mxu0 %v1011
  %1337 = vmatpush1.bf16.msra.mxu0 %v1010
  %1338 = vmatprep.subr.bf16.mxu0 %v1007
  %1339 = vmatpush1.bf16.msra.mxu0 %v1006
  %1340 = vmatprep.subr.bf16.mxu0 %v1003
  %1341 = vmatpush1.bf16.msra.mxu0 %v1002
  %1342 = vmatprep.subr.bf16.mxu0 %v999
  %1343 = vmatpush1.bf16.msra.mxu0 %v998
  %1344 = vmatprep.subr.bf16.mxu0 %v995
  %1345 = vmatpush1.bf16.msra.mxu0 %v994
  %1346 = vmatprep.subr.bf16.mxu0 %v991
  %1347 = vmatpush1.bf16.msra.mxu0 %v990
  %1348 = vmatprep.subr.bf16.mxu0 %v1051
  %1349 = vmatpush2.bf16.msra.mxu0 %v1050
  %1350 = vmatprep.subr.bf16.mxu0 %v1047
  %1351 = vmatpush2.bf16.msra.mxu0 %v1046
  %1352 = vmatprep.subr.bf16.mxu0 %v1043
  %1353 = vmatpush2.bf16.msra.mxu0 %v1042
  %1354 = vmatprep.subr.bf16.mxu0 %v1039
  %1355 = vmatpush2.bf16.msra.mxu0 %v1038
  %1356 = vmatprep.subr.bf16.mxu0 %v1035
  %1357 = vmatpush2.bf16.msra.mxu0 %v1034
  %1358 = vmatprep.subr.bf16.mxu0 %v1031
  %1359 = vmatpush2.bf16.msra.mxu0 %v1030
  %1360 = vmatprep.subr.bf16.mxu0 %v1027
  %1361 = vmatpush2.bf16.msra.mxu0 %v1026
  %1362 = vmatprep.subr.bf16.mxu0 %v1023
  %1363 = vmatpush2.bf16.msra.mxu0 %v1022
  %1364 = vmatprep.mubr.bf16.mxu0 %v279
  %1365 = vmatmul.mubr.bf16.gmra.mxu0 %v278
  %v1366 = vpop.f32.mrf.mxu0
  %v1367 = vadd.f32 %v1324, %v1366
  %v1368 = vpop.f32.mrf.mxu0
  %v1369 = vadd.f32 %v1326, %v1368
  %v1370 = vpop.f32.mrf.mxu0
  %v1371 = vadd.f32 %v1328, %v1370
  %v1372 = vpop.f32.mrf.mxu0
  %v1373 = vadd.f32 %v1330, %v1372
  %1374 = vdwg.mxu0
  %1375 = vmatprep.subr.bf16.mxu0 %v893
  %1376 = vmatpush1.bf16.msra.mxu0 %v892
  %1377 = vmatprep.subr.bf16.mxu0 %v889
  %1378 = vmatpush1.bf16.msra.mxu0 %v888
  %1379 = vmatprep.subr.bf16.mxu0 %v885
  %1380 = vmatpush1.bf16.msra.mxu0 %v884
  %1381 = vmatprep.subr.bf16.mxu0 %v881
  %1382 = vmatpush1.bf16.msra.mxu0 %v880
  %1383 = vmatprep.subr.bf16.mxu0 %v877
  %1384 = vmatpush1.bf16.msra.mxu0 %v876
  %1385 = vmatprep.subr.bf16.mxu0 %v873
  %1386 = vmatpush1.bf16.msra.mxu0 %v872
  %1387 = vmatprep.subr.bf16.mxu0 %v869
  %1388 = vmatpush1.bf16.msra.mxu0 %v868
  %1389 = vmatprep.subr.bf16.mxu0 %v865
  %1390 = vmatpush1.bf16.msra.mxu0 %v864
  %1391 = vmatprep.subr.bf16.mxu0 %v925
  %1392 = vmatpush2.bf16.msra.mxu0 %v924
  %1393 = vmatprep.subr.bf16.mxu0 %v921
  %1394 = vmatpush2.bf16.msra.mxu0 %v920
  %1395 = vmatprep.subr.bf16.mxu0 %v917
  %1396 = vmatpush2.bf16.msra.mxu0 %v916
  %1397 = vmatprep.subr.bf16.mxu0 %v913
  %1398 = vmatpush2.bf16.msra.mxu0 %v912
  %1399 = vmatprep.subr.bf16.mxu0 %v909
  %1400 = vmatpush2.bf16.msra.mxu0 %v908
  %1401 = vmatprep.subr.bf16.mxu0 %v905
  %1402 = vmatpush2.bf16.msra.mxu0 %v904
  %1403 = vmatprep.subr.bf16.mxu0 %v901
  %1404 = vmatpush2.bf16.msra.mxu0 %v900
  %1405 = vmatprep.subr.bf16.mxu0 %v897
  %1406 = vmatpush2.bf16.msra.mxu0 %v896
  %1407 = vmatprep.mubr.bf16.mxu0 %v275
  %1408 = vmatmul.mubr.bf16.gmra.mxu0 %v274
  %v1409 = vpop.f32.mrf.mxu0
  %v1410 = vadd.f32 %v247, %v1409
  %v1411 = vpop.f32.mrf.mxu0
  %v1412 = vadd.f32 %v251, %v1411
  %v1413 = vpop.f32.mrf.mxu0
  %v1414 = vadd.f32 %v247, %v1413
  %v1415 = vpop.f32.mrf.mxu0
  %v1416 = vadd.f32 %v251, %v1415
  %1417 = vdwg.mxu0
  %1418 = vmatprep.subr.bf16.mxu0 %v957
  %1419 = vmatpush1.bf16.msra.mxu0 %v956
  %1420 = vmatprep.subr.bf16.mxu0 %v953
  %1421 = vmatpush1.bf16.msra.mxu0 %v952
  %1422 = vmatprep.subr.bf16.mxu0 %v949
  %1423 = vmatpush1.bf16.msra.mxu0 %v948
  %1424 = vmatprep.subr.bf16.mxu0 %v945
  %1425 = vmatpush1.bf16.msra.mxu0 %v944
  %1426 = vmatprep.subr.bf16.mxu0 %v941
  %1427 = vmatpush1.bf16.msra.mxu0 %v940
  %1428 = vmatprep.subr.bf16.mxu0 %v937
  %1429 = vmatpush1.bf16.msra.mxu0 %v936
  %1430 = vmatprep.subr.bf16.mxu0 %v933
  %1431 = vmatpush1.bf16.msra.mxu0 %v932
  %1432 = vmatprep.subr.bf16.mxu0 %v929
  %1433 = vmatpush1.bf16.msra.mxu0 %v928
  %1434 = vmatprep.subr.bf16.mxu0 %v989
  %1435 = vmatpush2.bf16.msra.mxu0 %v988
  %1436 = vmatprep.subr.bf16.mxu0 %v985
  %1437 = vmatpush2.bf16.msra.mxu0 %v984
  %1438 = vmatprep.subr.bf16.mxu0 %v981
  %1439 = vmatpush2.bf16.msra.mxu0 %v980
  %1440 = vmatprep.subr.bf16.mxu0 %v977
  %1441 = vmatpush2.bf16.msra.mxu0 %v976
  %1442 = vmatprep.subr.bf16.mxu0 %v973
  %1443 = vmatpush2.bf16.msra.mxu0 %v972
  %1444 = vmatprep.subr.bf16.mxu0 %v969
  %1445 = vmatpush2.bf16.msra.mxu0 %v968
  %1446 = vmatprep.subr.bf16.mxu0 %v965
  %1447 = vmatpush2.bf16.msra.mxu0 %v964
  %1448 = vmatprep.subr.bf16.mxu0 %v961
  %1449 = vmatpush2.bf16.msra.mxu0 %v960
  %1450 = vmatprep.mubr.bf16.mxu0 %v277
  %1451 = vmatmul.mubr.bf16.gmra.mxu0 %v276
  %v1452 = vpop.f32.mrf.mxu0
  %v1453 = vadd.f32 %v1410, %v1452
  %v1454 = vpop.f32.mrf.mxu0
  %v1455 = vadd.f32 %v1412, %v1454
  %v1456 = vpop.f32.mrf.mxu0
  %v1457 = vadd.f32 %v1414, %v1456
  %v1458 = vpop.f32.mrf.mxu0
  %v1459 = vadd.f32 %v1416, %v1458
  %1460 = vdwg.mxu0
  %1461 = vmatprep.subr.bf16.mxu0 %v1021
  %1462 = vmatpush1.bf16.msra.mxu0 %v1020
  %1463 = vmatprep.subr.bf16.mxu0 %v1017
  %1464 = vmatpush1.bf16.msra.mxu0 %v1016
  %1465 = vmatprep.subr.bf16.mxu0 %v1013
  %1466 = vmatpush1.bf16.msra.mxu0 %v1012
  %1467 = vmatprep.subr.bf16.mxu0 %v1009
  %1468 = vmatpush1.bf16.msra.mxu0 %v1008
  %1469 = vmatprep.subr.bf16.mxu0 %v1005
  %1470 = vmatpush1.bf16.msra.mxu0 %v1004
  %1471 = vmatprep.subr.bf16.mxu0 %v1001
  %1472 = vmatpush1.bf16.msra.mxu0 %v1000
  %1473 = vmatprep.subr.bf16.mxu0 %v997
  %1474 = vmatpush1.bf16.msra.mxu0 %v996
  %1475 = vmatprep.subr.bf16.mxu0 %v993
  %1476 = vmatpush1.bf16.msra.mxu0 %v992
  %1477 = vmatprep.subr.bf16.mxu0 %v1053
  %1478 = vmatpush2.bf16.msra.mxu0 %v1052
  %1479 = vmatprep.subr.bf16.mxu0 %v1049
  %1480 = vmatpush2.bf16.msra.mxu0 %v1048
  %1481 = vmatprep.subr.bf16.mxu0 %v1045
  %1482 = vmatpush2.bf16.msra.mxu0 %v1044
  %1483 = vmatprep.subr.bf16.mxu0 %v1041
  %1484 = vmatpush2.bf16.msra.mxu0 %v1040
  %1485 = vmatprep.subr.bf16.mxu0 %v1037
  %1486 = vmatpush2.bf16.msra.mxu0 %v1036
  %1487 = vmatprep.subr.bf16.mxu0 %v1033
  %1488 = vmatpush2.bf16.msra.mxu0 %v1032
  %1489 = vmatprep.subr.bf16.mxu0 %v1029
  %1490 = vmatpush2.bf16.msra.mxu0 %v1028
  %1491 = vmatprep.subr.bf16.mxu0 %v1025
  %1492 = vmatpush2.bf16.msra.mxu0 %v1024
  %1493 = vmatprep.mubr.bf16.mxu0 %v279
  %1494 = vmatmul.mubr.bf16.gmra.mxu0 %v278
  %v1495 = vpop.f32.mrf.mxu0
  %v1496 = vadd.f32 %v1453, %v1495
  %v1497 = vpop.f32.mrf.mxu0
  %v1498 = vadd.f32 %v1455, %v1497
  %v1499 = vpop.f32.mrf.mxu0
  %v1500 = vadd.f32 %v1457, %v1499
  %v1501 = vpop.f32.mrf.mxu0
  %v1502 = vadd.f32 %v1459, %v1501
  %1503 = vdwg.mxu0
  %v1504 = vpack.c.bf16 %v1371, %v1367
  %v1505 = vpack.c.bf16 %v1373, %v1369
  %v1506 = vpack.c.bf16 %v1500, %v1496
  %v1507 = vpack.c.bf16 %v1502, %v1498
  %v1508 = vld [vmem:[%s3] sm:$0xff]
  %v1509 = vld [vmem:[%s3 + $0x8] sm:$0xff]
  %v1510 = vld [vmem:[%s3 + $0x10] sm:$0xff]
  %v1511 = vld [vmem:[%s3 + $0x18] sm:$0xff]
  %v1512 = vld [vmem:[%s3 + $0x20] sm:$0xff]
  %v1513 = vld [vmem:[%s3 + $0x28] sm:$0xff]
  %v1514 = vld [vmem:[%s3 + $0x30] sm:$0xff]
  %v1515 = vld [vmem:[%s3 + $0x38] sm:$0xff]
  %v1516 = vld [vmem:[%s3 + $0x40] sm:$0xff]
  %v1517 = vld [vmem:[%s3 + $0x48] sm:$0xff]
  %v1518 = vld [vmem:[%s3 + $0x50] sm:$0xff]
  %v1519 = vld [vmem:[%s3 + $0x58] sm:$0xff]
  %v1520 = vld [vmem:[%s3 + $0x60] sm:$0xff]
  %v1521 = vld [vmem:[%s3 + $0x68] sm:$0xff]
  %v1522 = vld [vmem:[%s3 + $0x70] sm:$0xff]
  %v1523 = vld [vmem:[%s3 + $0x78] sm:$0xff]
  %v1524 = vld [vmem:[%s3 + $0x80] sm:$0xff]
  %v1525 = vld [vmem:[%s3 + $0x88] sm:$0xff]
  %v1526 = vld [vmem:[%s3 + $0x90] sm:$0xff]
  %v1527 = vld [vmem:[%s3 + $0x98] sm:$0xff]
  %v1528 = vld [vmem:[%s3 + $0xa0] sm:$0xff]
  %v1529 = vld [vmem:[%s3 + $0xa8] sm:$0xff]
  %v1530 = vld [vmem:[%s3 + $0xb0] sm:$0xff]
  %v1531 = vld [vmem:[%s3 + $0xb8] sm:$0xff]
  %v1532 = vld [vmem:[%s3 + $0xc0] sm:$0xff]
  %v1533 = vld [vmem:[%s3 + $0xc8] sm:$0xff]
  %v1534 = vld [vmem:[%s3 + $0xd0] sm:$0xff]
  %v1535 = vld [vmem:[%s3 + $0xd8] sm:$0xff]
  %v1536 = vld [vmem:[%s3 + $0xe0] sm:$0xff]
  %v1537 = vld [vmem:[%s3 + $0xe8] sm:$0xff]
  %v1538 = vld [vmem:[%s3 + $0xf0] sm:$0xff]
  %v1539 = vld [vmem:[%s3 + $0xf8] sm:$0xff]
  %v1540 = vld [vmem:[%s3 + $0x100] sm:$0xff]
  %v1541 = vld [vmem:[%s3 + $0x108] sm:$0xff]
  %v1542 = vld [vmem:[%s3 + $0x110] sm:$0xff]
  %v1543 = vld [vmem:[%s3 + $0x118] sm:$0xff]
  %v1544 = vld [vmem:[%s3 + $0x120] sm:$0xff]
  %v1545 = vld [vmem:[%s3 + $0x128] sm:$0xff]
  %v1546 = vld [vmem:[%s3 + $0x130] sm:$0xff]
  %v1547 = vld [vmem:[%s3 + $0x138] sm:$0xff]
  %v1548 = vld [vmem:[%s3 + $0x140] sm:$0xff]
  %v1549 = vld [vmem:[%s3 + $0x148] sm:$0xff]
  %v1550 = vld [vmem:[%s3 + $0x150] sm:$0xff]
  %v1551 = vld [vmem:[%s3 + $0x158] sm:$0xff]
  %v1552 = vld [vmem:[%s3 + $0x160] sm:$0xff]
  %v1553 = vld [vmem:[%s3 + $0x168] sm:$0xff]
  %v1554 = vld [vmem:[%s3 + $0x170] sm:$0xff]
  %v1555 = vld [vmem:[%s3 + $0x178] sm:$0xff]
  %v1556 = vld [vmem:[%s3 + $0x180] sm:$0xff]
  %v1557 = vld [vmem:[%s3 + $0x188] sm:$0xff]
  %v1558 = vld [vmem:[%s3 + $0x190] sm:$0xff]
  %v1559 = vld [vmem:[%s3 + $0x198] sm:$0xff]
  %v1560 = vld [vmem:[%s3 + $0x1a0] sm:$0xff]
  %v1561 = vld [vmem:[%s3 + $0x1a8] sm:$0xff]
  %v1562 = vld [vmem:[%s3 + $0x1b0] sm:$0xff]
  %v1563 = vld [vmem:[%s3 + $0x1b8] sm:$0xff]
  %v1564 = vld [vmem:[%s3 + $0x1c0] sm:$0xff]
  %v1565 = vld [vmem:[%s3 + $0x1c8] sm:$0xff]
  %v1566 = vld [vmem:[%s3 + $0x1d0] sm:$0xff]
  %v1567 = vld [vmem:[%s3 + $0x1d8] sm:$0xff]
  %v1568 = vld [vmem:[%s3 + $0x1e0] sm:$0xff]
  %v1569 = vld [vmem:[%s3 + $0x1e8] sm:$0xff]
  %v1570 = vld [vmem:[%s3 + $0x1f0] sm:$0xff]
  %v1571 = vld [vmem:[%s3 + $0x1f8] sm:$0xff]
  %v1572 = vld [vmem:[%s4] sm:$0x3]
  %v1574 = vlaneseq
  %v1575 = vshrl.u32 %v1574, 7
  %v1576 = vsub.s32 0, %v1575
  %v1577 = vrot.slane %v1572, %v1576
  %v1578 = vlaneseq
  %v1579 = vshrl.u32 %v1578, 7
  %v1580 = vsub.s32 1, %v1579
  %v1581 = vrot.slane %v1572, %v1580
  %v1648 = vunpack.c.l.b16 %v1508
  %v1649 = vunpack.c.h.b16 %v1508
  %v1650 = vunpack.c.l.b16 %v1509
  %v1651 = vunpack.c.h.b16 %v1509
  %v1652 = vunpack.c.l.b16 %v1510
  %v1653 = vunpack.c.h.b16 %v1510
  %v1654 = vunpack.c.l.b16 %v1511
  %v1655 = vunpack.c.h.b16 %v1511
  %v1656 = vunpack.c.l.b16 %v1512
  %v1657 = vunpack.c.h.b16 %v1512
  %v1658 = vunpack.c.l.b16 %v1513
  %v1659 = vunpack.c.h.b16 %v1513
  %v1660 = vunpack.c.l.b16 %v1514
  %v1661 = vunpack.c.h.b16 %v1514
  %v1662 = vunpack.c.l.b16 %v1515
  %v1663 = vunpack.c.h.b16 %v1515
  %v1664 = vunpack.c.l.b16 %v1516
  %v1665 = vunpack.c.h.b16 %v1516
  %v1666 = vunpack.c.l.b16 %v1517
  %v1667 = vunpack.c.h.b16 %v1517
  %v1668 = vunpack.c.l.b16 %v1518
  %v1669 = vunpack.c.h.b16 %v1518
  %v1670 = vunpack.c.l.b16 %v1519
  %v1671 = vunpack.c.h.b16 %v1519
  %v1672 = vunpack.c.l.b16 %v1520
  %v1673 = vunpack.c.h.b16 %v1520
  %v1674 = vunpack.c.l.b16 %v1521
  %v1675 = vunpack.c.h.b16 %v1521
  %v1676 = vunpack.c.l.b16 %v1522
  %v1677 = vunpack.c.h.b16 %v1522
  %v1678 = vunpack.c.l.b16 %v1523
  %v1679 = vunpack.c.h.b16 %v1523
  %v1680 = vunpack.c.l.b16 %v1524
  %v1681 = vunpack.c.h.b16 %v1524
  %v1682 = vunpack.c.l.b16 %v1525
  %v1683 = vunpack.c.h.b16 %v1525
  %v1684 = vunpack.c.l.b16 %v1526
  %v1685 = vunpack.c.h.b16 %v1526
  %v1686 = vunpack.c.l.b16 %v1527
  %v1687 = vunpack.c.h.b16 %v1527
  %v1688 = vunpack.c.l.b16 %v1528
  %v1689 = vunpack.c.h.b16 %v1528
  %v1690 = vunpack.c.l.b16 %v1529
  %v1691 = vunpack.c.h.b16 %v1529
  %v1692 = vunpack.c.l.b16 %v1530
  %v1693 = vunpack.c.h.b16 %v1530
  %v1694 = vunpack.c.l.b16 %v1531
  %v1695 = vunpack.c.h.b16 %v1531
  %v1696 = vunpack.c.l.b16 %v1532
  %v1697 = vunpack.c.h.b16 %v1532
  %v1698 = vunpack.c.l.b16 %v1533
  %v1699 = vunpack.c.h.b16 %v1533
  %v1700 = vunpack.c.l.b16 %v1534
  %v1701 = vunpack.c.h.b16 %v1534
  %v1702 = vunpack.c.l.b16 %v1535
  %v1703 = vunpack.c.h.b16 %v1535
  %v1704 = vunpack.c.l.b16 %v1536
  %v1705 = vunpack.c.h.b16 %v1536
  %v1706 = vunpack.c.l.b16 %v1537
  %v1707 = vunpack.c.h.b16 %v1537
  %v1708 = vunpack.c.l.b16 %v1538
  %v1709 = vunpack.c.h.b16 %v1538
  %v1710 = vunpack.c.l.b16 %v1539
  %v1711 = vunpack.c.h.b16 %v1539
  %v1712 = vunpack.c.l.b16 %v1540
  %v1713 = vunpack.c.h.b16 %v1540
  %v1714 = vunpack.c.l.b16 %v1541
  %v1715 = vunpack.c.h.b16 %v1541
  %v1716 = vunpack.c.l.b16 %v1542
  %v1717 = vunpack.c.h.b16 %v1542
  %v1718 = vunpack.c.l.b16 %v1543
  %v1719 = vunpack.c.h.b16 %v1543
  %v1720 = vunpack.c.l.b16 %v1544
  %v1721 = vunpack.c.h.b16 %v1544
  %v1722 = vunpack.c.l.b16 %v1545
  %v1723 = vunpack.c.h.b16 %v1545
  %v1724 = vunpack.c.l.b16 %v1546
  %v1725 = vunpack.c.h.b16 %v1546
  %v1726 = vunpack.c.l.b16 %v1547
  %v1727 = vunpack.c.h.b16 %v1547
  %v1728 = vunpack.c.l.b16 %v1548
  %v1729 = vunpack.c.h.b16 %v1548
  %v1730 = vunpack.c.l.b16 %v1549
  %v1731 = vunpack.c.h.b16 %v1549
  %v1732 = vunpack.c.l.b16 %v1550
  %v1733 = vunpack.c.h.b16 %v1550
  %v1734 = vunpack.c.l.b16 %v1551
  %v1735 = vunpack.c.h.b16 %v1551
  %v1736 = vunpack.c.l.b16 %v1552
  %v1737 = vunpack.c.h.b16 %v1552
  %v1738 = vunpack.c.l.b16 %v1553
  %v1739 = vunpack.c.h.b16 %v1553
  %v1740 = vunpack.c.l.b16 %v1554
  %v1741 = vunpack.c.h.b16 %v1554
  %v1742 = vunpack.c.l.b16 %v1555
  %v1743 = vunpack.c.h.b16 %v1555
  %v1744 = vunpack.c.l.b16 %v1556
  %v1745 = vunpack.c.h.b16 %v1556
  %v1746 = vunpack.c.l.b16 %v1557
  %v1747 = vunpack.c.h.b16 %v1557
  %v1748 = vunpack.c.l.b16 %v1558
  %v1749 = vunpack.c.h.b16 %v1558
  %v1750 = vunpack.c.l.b16 %v1559
  %v1751 = vunpack.c.h.b16 %v1559
  %v1752 = vunpack.c.l.b16 %v1560
  %v1753 = vunpack.c.h.b16 %v1560
  %v1754 = vunpack.c.l.b16 %v1561
  %v1755 = vunpack.c.h.b16 %v1561
  %v1756 = vunpack.c.l.b16 %v1562
  %v1757 = vunpack.c.h.b16 %v1562
  %v1758 = vunpack.c.l.b16 %v1563
  %v1759 = vunpack.c.h.b16 %v1563
  %v1760 = vunpack.c.l.b16 %v1564
  %v1761 = vunpack.c.h.b16 %v1564
  %v1762 = vunpack.c.l.b16 %v1565
  %v1763 = vunpack.c.h.b16 %v1565
  %v1764 = vunpack.c.l.b16 %v1566
  %v1765 = vunpack.c.h.b16 %v1566
  %v1766 = vunpack.c.l.b16 %v1567
  %v1767 = vunpack.c.h.b16 %v1567
  %v1768 = vunpack.c.l.b16 %v1568
  %v1769 = vunpack.c.h.b16 %v1568
  %v1770 = vunpack.c.l.b16 %v1569
  %v1771 = vunpack.c.h.b16 %v1569
  %v1772 = vunpack.c.l.b16 %v1570
  %v1773 = vunpack.c.h.b16 %v1570
  %v1774 = vunpack.c.l.b16 %v1571
  %v1775 = vunpack.c.h.b16 %v1571
  %v1776 = vpack.c.b16 %v1650, %v1648
  %v1777 = vpack.c.b16 %v1651, %v1649
  %v1778 = vpack.c.b16 %v1654, %v1652
  %v1779 = vpack.c.b16 %v1655, %v1653
  %v1780 = vpack.c.b16 %v1658, %v1656
  %v1781 = vpack.c.b16 %v1659, %v1657
  %v1782 = vpack.c.b16 %v1662, %v1660
  %v1783 = vpack.c.b16 %v1663, %v1661
  %v1784 = vpack.c.b16 %v1666, %v1664
  %v1785 = vpack.c.b16 %v1667, %v1665
  %v1786 = vpack.c.b16 %v1670, %v1668
  %v1787 = vpack.c.b16 %v1671, %v1669
  %v1788 = vpack.c.b16 %v1674, %v1672
  %v1789 = vpack.c.b16 %v1675, %v1673
  %v1790 = vpack.c.b16 %v1678, %v1676
  %v1791 = vpack.c.b16 %v1679, %v1677
  %v1792 = vpack.c.b16 %v1682, %v1680
  %v1793 = vpack.c.b16 %v1683, %v1681
  %v1794 = vpack.c.b16 %v1686, %v1684
  %v1795 = vpack.c.b16 %v1687, %v1685
  %v1796 = vpack.c.b16 %v1690, %v1688
  %v1797 = vpack.c.b16 %v1691, %v1689
  %v1798 = vpack.c.b16 %v1694, %v1692
  %v1799 = vpack.c.b16 %v1695, %v1693
  %v1800 = vpack.c.b16 %v1698, %v1696
  %v1801 = vpack.c.b16 %v1699, %v1697
  %v1802 = vpack.c.b16 %v1702, %v1700
  %v1803 = vpack.c.b16 %v1703, %v1701
  %v1804 = vpack.c.b16 %v1706, %v1704
  %v1805 = vpack.c.b16 %v1707, %v1705
  %v1806 = vpack.c.b16 %v1710, %v1708
  %v1807 = vpack.c.b16 %v1711, %v1709
  %v1808 = vpack.c.b16 %v1714, %v1712
  %v1809 = vpack.c.b16 %v1715, %v1713
  %v1810 = vpack.c.b16 %v1718, %v1716
  %v1811 = vpack.c.b16 %v1719, %v1717
  %v1812 = vpack.c.b16 %v1722, %v1720
  %v1813 = vpack.c.b16 %v1723, %v1721
  %v1814 = vpack.c.b16 %v1726, %v1724
  %v1815 = vpack.c.b16 %v1727, %v1725
  %v1816 = vpack.c.b16 %v1730, %v1728
  %v1817 = vpack.c.b16 %v1731, %v1729
  %v1818 = vpack.c.b16 %v1734, %v1732
  %v1819 = vpack.c.b16 %v1735, %v1733
  %v1820 = vpack.c.b16 %v1738, %v1736
  %v1821 = vpack.c.b16 %v1739, %v1737
  %v1822 = vpack.c.b16 %v1742, %v1740
  %v1823 = vpack.c.b16 %v1743, %v1741
  %v1824 = vpack.c.b16 %v1746, %v1744
  %v1825 = vpack.c.b16 %v1747, %v1745
  %v1826 = vpack.c.b16 %v1750, %v1748
  %v1827 = vpack.c.b16 %v1751, %v1749
  %v1828 = vpack.c.b16 %v1754, %v1752
  %v1829 = vpack.c.b16 %v1755, %v1753
  %v1830 = vpack.c.b16 %v1758, %v1756
  %v1831 = vpack.c.b16 %v1759, %v1757
  %v1832 = vpack.c.b16 %v1762, %v1760
  %v1833 = vpack.c.b16 %v1763, %v1761
  %v1834 = vpack.c.b16 %v1766, %v1764
  %v1835 = vpack.c.b16 %v1767, %v1765
  %v1836 = vpack.c.b16 %v1770, %v1768
  %v1837 = vpack.c.b16 %v1771, %v1769
  %v1838 = vpack.c.b16 %v1774, %v1772
  %v1839 = vpack.c.b16 %v1775, %v1773
  %1904 = vmatprep.subr.bf16.mxu0 %v1791
  %1905 = vmatpush1.bf16.msra.mxu0 %v1790
  %1906 = vmatprep.subr.bf16.mxu0 %v1789
  %1907 = vmatpush1.bf16.msra.mxu0 %v1788
  %1908 = vmatprep.subr.bf16.mxu0 %v1787
  %1909 = vmatpush1.bf16.msra.mxu0 %v1786
  %1910 = vmatprep.subr.bf16.mxu0 %v1785
  %1911 = vmatpush1.bf16.msra.mxu0 %v1784
  %1912 = vmatprep.subr.bf16.mxu0 %v1783
  %1913 = vmatpush1.bf16.msra.mxu0 %v1782
  %1914 = vmatprep.subr.bf16.mxu0 %v1781
  %1915 = vmatpush1.bf16.msra.mxu0 %v1780
  %1916 = vmatprep.subr.bf16.mxu0 %v1779
  %1917 = vmatpush1.bf16.msra.mxu0 %v1778
  %1918 = vmatprep.subr.bf16.mxu0 %v1777
  %1919 = vmatpush1.bf16.msra.mxu0 %v1776
  %1920 = vmatprep.subr.bf16.mxu0 %v1807
  %1921 = vmatpush2.bf16.msra.mxu0 %v1806
  %1922 = vmatprep.subr.bf16.mxu0 %v1805
  %1923 = vmatpush2.bf16.msra.mxu0 %v1804
  %1924 = vmatprep.subr.bf16.mxu0 %v1803
  %1925 = vmatpush2.bf16.msra.mxu0 %v1802
  %1926 = vmatprep.subr.bf16.mxu0 %v1801
  %1927 = vmatpush2.bf16.msra.mxu0 %v1800
  %1928 = vmatprep.subr.bf16.mxu0 %v1799
  %1929 = vmatpush2.bf16.msra.mxu0 %v1798
  %1930 = vmatprep.subr.bf16.mxu0 %v1797
  %1931 = vmatpush2.bf16.msra.mxu0 %v1796
  %1932 = vmatprep.subr.bf16.mxu0 %v1795
  %1933 = vmatpush2.bf16.msra.mxu0 %v1794
  %1934 = vmatprep.subr.bf16.mxu0 %v1793
  %1935 = vmatpush2.bf16.msra.mxu0 %v1792
  %1936 = vmatprep.mubr.bf16.mxu0 %v1505
  %1937 = vmatmul.mubr.bf16.gmra.mxu0 %v1504
  %v1938 = vpop.f32.mrf.mxu0
  %v1939 = vadd.f32 %v1577, %v1938
  %v1940 = vpop.f32.mrf.mxu0
  %v1941 = vadd.f32 %v1581, %v1940
  %v1942 = vpop.f32.mrf.mxu0
  %v1943 = vadd.f32 %v1577, %v1942
  %v1944 = vpop.f32.mrf.mxu0
  %v1945 = vadd.f32 %v1581, %v1944
  %1946 = vdwg.mxu0
  %1947 = vmatprep.subr.bf16.mxu0 %v1823
  %1948 = vmatpush1.bf16.msra.mxu0 %v1822
  %1949 = vmatprep.subr.bf16.mxu0 %v1821
  %1950 = vmatpush1.bf16.msra.mxu0 %v1820
  %1951 = vmatprep.subr.bf16.mxu0 %v1819
  %1952 = vmatpush1.bf16.msra.mxu0 %v1818
  %1953 = vmatprep.subr.bf16.mxu0 %v1817
  %1954 = vmatpush1.bf16.msra.mxu0 %v1816
  %1955 = vmatprep.subr.bf16.mxu0 %v1815
  %1956 = vmatpush1.bf16.msra.mxu0 %v1814
  %1957 = vmatprep.subr.bf16.mxu0 %v1813
  %1958 = vmatpush1.bf16.msra.mxu0 %v1812
  %1959 = vmatprep.subr.bf16.mxu0 %v1811
  %1960 = vmatpush1.bf16.msra.mxu0 %v1810
  %1961 = vmatprep.subr.bf16.mxu0 %v1809
  %1962 = vmatpush1.bf16.msra.mxu0 %v1808
  %1963 = vmatprep.subr.bf16.mxu0 %v1839
  %1964 = vmatpush2.bf16.msra.mxu0 %v1838
  %1965 = vmatprep.subr.bf16.mxu0 %v1837
  %1966 = vmatpush2.bf16.msra.mxu0 %v1836
  %1967 = vmatprep.subr.bf16.mxu0 %v1835
  %1968 = vmatpush2.bf16.msra.mxu0 %v1834
  %1969 = vmatprep.subr.bf16.mxu0 %v1833
  %1970 = vmatpush2.bf16.msra.mxu0 %v1832
  %1971 = vmatprep.subr.bf16.mxu0 %v1831
  %1972 = vmatpush2.bf16.msra.mxu0 %v1830
  %1973 = vmatprep.subr.bf16.mxu0 %v1829
  %1974 = vmatpush2.bf16.msra.mxu0 %v1828
  %1975 = vmatprep.subr.bf16.mxu0 %v1827
  %1976 = vmatpush2.bf16.msra.mxu0 %v1826
  %1977 = vmatprep.subr.bf16.mxu0 %v1825
  %1978 = vmatpush2.bf16.msra.mxu0 %v1824
  %1979 = vmatprep.mubr.bf16.mxu0 %v1507
  %1980 = vmatmul.mubr.bf16.gmra.mxu0 %v1506
  %v1981 = vpop.f32.mrf.mxu0
  %v1982 = vadd.f32 %v1939, %v1981
  %v1983 = vpop.f32.mrf.mxu0
  %v1984 = vadd.f32 %v1941, %v1983
  %v1985 = vpop.f32.mrf.mxu0
  %v1986 = vadd.f32 %v1943, %v1985
  %v1987 = vpop.f32.mrf.mxu0
  %v1988 = vadd.f32 %v1945, %v1987
  %1989 = vdwg.mxu0
  %v1990 = vmax.f32 %v1982, 0.0
  %v1991 = vmax.f32 %v1984, 0.0
  %v1992 = vmax.f32 %v1986, 0.0
  %v1993 = vmax.f32 %v1988, 0.0
  %v1994 = vpack.c.bf16 %v1992, %v1990
  %v1995 = vld [vmem:[%s5] sm:$0xf]
  %v1996 = vld [vmem:[%s5 + $0x4] sm:$0xf]
  %v1997 = vld [vmem:[%s5 + $0x8] sm:$0xf]
  %v1998 = vld [vmem:[%s5 + $0xc] sm:$0xf]
  %v1999 = vld [vmem:[%s5 + $0x10] sm:$0xf]
  %v2000 = vld [vmem:[%s5 + $0x14] sm:$0xf]
  %v2001 = vld [vmem:[%s5 + $0x18] sm:$0xf]
  %v2002 = vld [vmem:[%s5 + $0x1c] sm:$0xf]
  %v2003 = vld [vmem:[%s5 + $0x20] sm:$0xf]
  %v2004 = vld [vmem:[%s5 + $0x24] sm:$0xf]
  %v2005 = vld [vmem:[%s5 + $0x28] sm:$0xf]
  %v2006 = vld [vmem:[%s5 + $0x2c] sm:$0xf]
  %v2007 = vld [vmem:[%s5 + $0x30] sm:$0xf]
  %v2008 = vld [vmem:[%s5 + $0x34] sm:$0xf]
  %v2009 = vld [vmem:[%s5 + $0x38] sm:$0xf]
  %v2010 = vld [vmem:[%s5 + $0x3c] sm:$0xf]
  %v2011 = vld [vmem:[%s6] sm:$0x1]
  %v2013 = vlaneseq
  %v2014 = vshrl.u32 %v2013, 7
  %v2015 = vsub.s32 0, %v2014
  %v2016 = vrot.slane %v2011, %v2015
  %v2034 = vunpack.c.l.b16 %v1995
  %v2035 = vunpack.c.l.b16 %v1996
  %v2036 = vunpack.c.l.b16 %v1997
  %v2037 = vunpack.c.l.b16 %v1998
  %v2038 = vunpack.c.l.b16 %v1999
  %v2039 = vunpack.c.l.b16 %v2000
  %v2040 = vunpack.c.l.b16 %v2001
  %v2041 = vunpack.c.l.b16 %v2002
  %v2042 = vunpack.c.l.b16 %v2003
  %v2043 = vunpack.c.l.b16 %v2004
  %v2044 = vunpack.c.l.b16 %v2005
  %v2045 = vunpack.c.l.b16 %v2006
  %v2046 = vunpack.c.l.b16 %v2007
  %v2047 = vunpack.c.l.b16 %v2008
  %v2048 = vunpack.c.l.b16 %v2009
  %v2049 = vunpack.c.l.b16 %v2010
  %v2050 = vpack.c.b16 %v2035, %v2034
  %v2051 = vpack.c.b16 %v2037, %v2036
  %v2052 = vpack.c.b16 %v2039, %v2038
  %v2053 = vpack.c.b16 %v2041, %v2040
  %v2054 = vpack.c.b16 %v2043, %v2042
  %v2055 = vpack.c.b16 %v2045, %v2044
  %v2056 = vpack.c.b16 %v2047, %v2046
  %v2057 = vpack.c.b16 %v2049, %v2048
  %2066 = vmatprep.subr.bf16.mxu0 0
  %2067 = vmatpush1.bf16.msra.mxu0 %v2057
  %2068 = vmatprep.subr.bf16.mxu0 0
  %2069 = vmatpush1.bf16.msra.mxu0 %v2056
  %2070 = vmatprep.subr.bf16.mxu0 0
  %2071 = vmatpush1.bf16.msra.mxu0 %v2055
  %2072 = vmatprep.subr.bf16.mxu0 0
  %2073 = vmatpush1.bf16.msra.mxu0 %v2054
  %2074 = vmatprep.subr.bf16.mxu0 0
  %2075 = vmatpush1.bf16.msra.mxu0 %v2053
  %2076 = vmatprep.subr.bf16.mxu0 0
  %2077 = vmatpush1.bf16.msra.mxu0 %v2052
  %2078 = vmatprep.subr.bf16.mxu0 0
  %2079 = vmatpush1.bf16.msra.mxu0 %v2051
  %2080 = vmatprep.subr.bf16.mxu0 0
  %2081 = vmatpush1.bf16.msra.mxu0 %v2050
  %2082 = vmatprep.subr.bf16.mxu0 0
  %2083 = vmatpush2.bf16.msra.mxu0 0
  %2084 = vmatprep.subr.bf16.mxu0 0
  %2085 = vmatpush2.bf16.msra.mxu0 0
  %2086 = vmatprep.subr.bf16.mxu0 0
  %2087 = vmatpush2.bf16.msra.mxu0 0
  %2088 = vmatprep.subr.bf16.mxu0 0
  %2089 = vmatpush2.bf16.msra.mxu0 0
  %2090 = vmatprep.subr.bf16.mxu0 0
  %2091 = vmatpush2.bf16.msra.mxu0 0
  %2092 = vmatprep.subr.bf16.mxu0 0
  %2093 = vmatpush2.bf16.msra.mxu0 0
  %2094 = vmatprep.subr.bf16.mxu0 0
  %2095 = vmatpush2.bf16.msra.mxu0 0
  %2096 = vmatprep.subr.bf16.mxu0 0
  %2097 = vmatpush2.bf16.msra.mxu0 0
  %2098 = vmatprep.mubr.bf16.mxu0 0
  %2099 = vmatmul.mubr.bf16.gmra.mxu0 %v1994
  %v2100 = vpop.f32.mrf.mxu0
  %v2101 = vadd.f32 %v2016, %v2100
  %v2102 = vpop.f32.mrf.mxu0
  %v2103 = vpop.f32.mrf.mxu0
  %v2104 = vadd.f32 %v2016, %v2103
  %v2105 = vpop.f32.mrf.mxu0
  %2106 = vdwg.mxu0
  %v2107 = vmax.f32 %v2101, 0.0
  %v2108 = vmax.f32 %v2104, 0.0
  %v2109 = vpack.c.bf16 %v2108, %v2107
  %v2110 = vld [vmem:[%s7] sm:$0xf]
  %v2111 = vld [vmem:[%s7 + $0x4] sm:$0xf]
  %v2112 = vld [vmem:[%s7 + $0x8] sm:$0xf]
  %v2113 = vld [vmem:[%s7 + $0xc] sm:$0xf]
  %v2114 = vld [vmem:[%s7 + $0x10] sm:$0xf]
  %v2115 = vld [vmem:[%s7 + $0x14] sm:$0xf]
  %v2116 = vld [vmem:[%s7 + $0x18] sm:$0xf]
  %v2117 = vld [vmem:[%s7 + $0x1c] sm:$0xf]
  %v2118 = vld [vmem:[%s7 + $0x20] sm:$0xf]
  %v2119 = vld [vmem:[%s7 + $0x24] sm:$0xf]
  %v2120 = vld [vmem:[%s7 + $0x28] sm:$0xf]
  %v2121 = vld [vmem:[%s7 + $0x2c] sm:$0xf]
  %v2122 = vld [vmem:[%s7 + $0x30] sm:$0xf]
  %v2123 = vld [vmem:[%s7 + $0x34] sm:$0xf]
  %v2124 = vld [vmem:[%s7 + $0x38] sm:$0xf]
  %v2125 = vld [vmem:[%s7 + $0x3c] sm:$0xf]
  %v2126 = vpack.c.bf16 %v1993, %v1991
  %v2127 = vld [vmem:[%s8] sm:$0xf]
  %v2128 = vld [vmem:[%s8 + $0x4] sm:$0xf]
  %v2129 = vld [vmem:[%s8 + $0x8] sm:$0xf]
  %v2130 = vld [vmem:[%s8 + $0xc] sm:$0xf]
  %v2131 = vld [vmem:[%s8 + $0x10] sm:$0xf]
  %v2132 = vld [vmem:[%s8 + $0x14] sm:$0xf]
  %v2133 = vld [vmem:[%s8 + $0x18] sm:$0xf]
  %v2134 = vld [vmem:[%s8 + $0x1c] sm:$0xf]
  %v2135 = vld [vmem:[%s8 + $0x20] sm:$0xf]
  %v2136 = vld [vmem:[%s8 + $0x24] sm:$0xf]
  %v2137 = vld [vmem:[%s8 + $0x28] sm:$0xf]
  %v2138 = vld [vmem:[%s8 + $0x2c] sm:$0xf]
  %v2139 = vld [vmem:[%s8 + $0x30] sm:$0xf]
  %v2140 = vld [vmem:[%s8 + $0x34] sm:$0xf]
  %v2141 = vld [vmem:[%s8 + $0x38] sm:$0xf]
  %v2142 = vld [vmem:[%s8 + $0x3c] sm:$0xf]
  %v2159 = vunpack.c.l.b16 %v2127
  %v2160 = vunpack.c.l.b16 %v2128
  %v2161 = vunpack.c.l.b16 %v2129
  %v2162 = vunpack.c.l.b16 %v2130
  %v2163 = vunpack.c.l.b16 %v2131
  %v2164 = vunpack.c.l.b16 %v2132
  %v2165 = vunpack.c.l.b16 %v2133
  %v2166 = vunpack.c.l.b16 %v2134
  %v2167 = vunpack.c.l.b16 %v2135
  %v2168 = vunpack.c.l.b16 %v2136
  %v2169 = vunpack.c.l.b16 %v2137
  %v2170 = vunpack.c.l.b16 %v2138
  %v2171 = vunpack.c.l.b16 %v2139
  %v2172 = vunpack.c.l.b16 %v2140
  %v2173 = vunpack.c.l.b16 %v2141
  %v2174 = vunpack.c.l.b16 %v2142
  %v2175 = vpack.c.b16 %v2160, %v2159
  %v2176 = vpack.c.b16 %v2162, %v2161
  %v2177 = vpack.c.b16 %v2164, %v2163
  %v2178 = vpack.c.b16 %v2166, %v2165
  %v2179 = vpack.c.b16 %v2168, %v2167
  %v2180 = vpack.c.b16 %v2170, %v2169
  %v2181 = vpack.c.b16 %v2172, %v2171
  %v2182 = vpack.c.b16 %v2174, %v2173
  %2191 = vmatprep.subr.bf16.mxu0 0
  %2192 = vmatpush1.bf16.msra.mxu0 %v2182
  %2193 = vmatprep.subr.bf16.mxu0 0
  %2194 = vmatpush1.bf16.msra.mxu0 %v2181
  %2195 = vmatprep.subr.bf16.mxu0 0
  %2196 = vmatpush1.bf16.msra.mxu0 %v2180
  %2197 = vmatprep.subr.bf16.mxu0 0
  %2198 = vmatpush1.bf16.msra.mxu0 %v2179
  %2199 = vmatprep.subr.bf16.mxu0 0
  %2200 = vmatpush1.bf16.msra.mxu0 %v2178
  %2201 = vmatprep.subr.bf16.mxu0 0
  %2202 = vmatpush1.bf16.msra.mxu0 %v2177
  %2203 = vmatprep.subr.bf16.mxu0 0
  %2204 = vmatpush1.bf16.msra.mxu0 %v2176
  %2205 = vmatprep.subr.bf16.mxu0 0
  %2206 = vmatpush1.bf16.msra.mxu0 %v2175
  %2207 = vmatprep.subr.bf16.mxu0 0
  %2208 = vmatpush2.bf16.msra.mxu0 0
  %2209 = vmatprep.subr.bf16.mxu0 0
  %2210 = vmatpush2.bf16.msra.mxu0 0
  %2211 = vmatprep.subr.bf16.mxu0 0
  %2212 = vmatpush2.bf16.msra.mxu0 0
  %2213 = vmatprep.subr.bf16.mxu0 0
  %2214 = vmatpush2.bf16.msra.mxu0 0
  %2215 = vmatprep.subr.bf16.mxu0 0
  %2216 = vmatpush2.bf16.msra.mxu0 0
  %2217 = vmatprep.subr.bf16.mxu0 0
  %2218 = vmatpush2.bf16.msra.mxu0 0
  %2219 = vmatprep.subr.bf16.mxu0 0
  %2220 = vmatpush2.bf16.msra.mxu0 0
  %2221 = vmatprep.subr.bf16.mxu0 0
  %2222 = vmatpush2.bf16.msra.mxu0 0
  %2223 = vmatprep.mubr.bf16.mxu0 0
  %2224 = vmatmul.mubr.bf16.gmra.mxu0 %v2126
  %v2225 = vpop.f32.mrf.mxu0
  %v2226 = vadd.f32 0.0, %v2225
  %v2227 = vpop.f32.mrf.mxu0
  %v2228 = vpop.f32.mrf.mxu0
  %v2229 = vadd.f32 0.0, %v2228
  %v2230 = vpop.f32.mrf.mxu0
  %2231 = vdwg.mxu0
  %v2248 = vunpack.c.l.b16 %v2110
  %v2249 = vunpack.c.l.b16 %v2111
  %v2250 = vunpack.c.l.b16 %v2112
  %v2251 = vunpack.c.l.b16 %v2113
  %v2252 = vunpack.c.l.b16 %v2114
  %v2253 = vunpack.c.l.b16 %v2115
  %v2254 = vunpack.c.l.b16 %v2116
  %v2255 = vunpack.c.l.b16 %v2117
  %v2256 = vunpack.c.l.b16 %v2118
  %v2257 = vunpack.c.l.b16 %v2119
  %v2258 = vunpack.c.l.b16 %v2120
  %v2259 = vunpack.c.l.b16 %v2121
  %v2260 = vunpack.c.l.b16 %v2122
  %v2261 = vunpack.c.l.b16 %v2123
  %v2262 = vunpack.c.l.b16 %v2124
  %v2263 = vunpack.c.l.b16 %v2125
  %v2264 = vpack.c.b16 %v2249, %v2248
  %v2265 = vpack.c.b16 %v2251, %v2250
  %v2266 = vpack.c.b16 %v2253, %v2252
  %v2267 = vpack.c.b16 %v2255, %v2254
  %v2268 = vpack.c.b16 %v2257, %v2256
  %v2269 = vpack.c.b16 %v2259, %v2258
  %v2270 = vpack.c.b16 %v2261, %v2260
  %v2271 = vpack.c.b16 %v2263, %v2262
  %2280 = vmatprep.subr.bf16.mxu0 0
  %2281 = vmatpush1.bf16.msra.mxu0 %v2271
  %2282 = vmatprep.subr.bf16.mxu0 0
  %2283 = vmatpush1.bf16.msra.mxu0 %v2270
  %2284 = vmatprep.subr.bf16.mxu0 0
  %2285 = vmatpush1.bf16.msra.mxu0 %v2269
  %2286 = vmatprep.subr.bf16.mxu0 0
  %2287 = vmatpush1.bf16.msra.mxu0 %v2268
  %2288 = vmatprep.subr.bf16.mxu0 0
  %2289 = vmatpush1.bf16.msra.mxu0 %v2267
  %2290 = vmatprep.subr.bf16.mxu0 0
  %2291 = vmatpush1.bf16.msra.mxu0 %v2266
  %2292 = vmatprep.subr.bf16.mxu0 0
  %2293 = vmatpush1.bf16.msra.mxu0 %v2265
  %2294 = vmatprep.subr.bf16.mxu0 0
  %2295 = vmatpush1.bf16.msra.mxu0 %v2264
  %2296 = vmatprep.subr.bf16.mxu0 0
  %2297 = vmatpush2.bf16.msra.mxu0 0
  %2298 = vmatprep.subr.bf16.mxu0 0
  %2299 = vmatpush2.bf16.msra.mxu0 0
  %2300 = vmatprep.subr.bf16.mxu0 0
  %2301 = vmatpush2.bf16.msra.mxu0 0
  %2302 = vmatprep.subr.bf16.mxu0 0
  %2303 = vmatpush2.bf16.msra.mxu0 0
  %2304 = vmatprep.subr.bf16.mxu0 0
  %2305 = vmatpush2.bf16.msra.mxu0 0
  %2306 = vmatprep.subr.bf16.mxu0 0
  %2307 = vmatpush2.bf16.msra.mxu0 0
  %2308 = vmatprep.subr.bf16.mxu0 0
  %2309 = vmatpush2.bf16.msra.mxu0 0
  %2310 = vmatprep.subr.bf16.mxu0 0
  %2311 = vmatpush2.bf16.msra.mxu0 0
  %2312 = vmatprep.mubr.bf16.mxu0 0
  %2313 = vmatmul.mubr.bf16.gmra.mxu0 %v2109
  %v2314 = vpop.f32.mrf.mxu0
  %v2315 = vadd.f32 %v2226, %v2314
  %v2316 = vpop.f32.mrf.mxu0
  %v2317 = vpop.f32.mrf.mxu0
  %v2318 = vadd.f32 %v2229, %v2317
  %v2319 = vpop.f32.mrf.mxu0
  %2320 = vdwg.mxu0
  %v2321 = vld [vmem:[%s9] sm:$0x1]
  %v2323 = vlaneseq
  %v2324 = vshrl.u32 %v2323, 7
  %v2325 = vsub.s32 0, %v2324
  %v2326 = vrot.slane %v2321, %v2325
  %v2328 = vadd.f32 %v2315, %v2326
  %v2329 = vadd.f32 %v2318, %v2326
  %2330 = vst [vmem:[%s10] sm:$0xff] %v2328
  %2331 = vst [vmem:[%s10 + $0x8] sm:$0xff] %v2329
  // Predicated region
  $region42: #{revgrad_onestep_forward.1} parent=0 // pred_check
    _
  $region43: #{revgrad_onestep_forward.1} parent=0 // pred_check_branch
    %2333 = sbr.rel (0) target = $region45
  $region44: #{revgrad_onestep_forward.1} parent=0 // pred_region
    _
  $region45: #{revgrad_onestep_forward.1} parent=0 // pred_fallthru
    _
  // Predicated region
  $region46: #{revgrad_onestep_forward.1} parent=0 // pred_check
    _
  $region47: #{revgrad_onestep_forward.1} parent=0 // pred_check_branch
    %2335 = sbr.rel (0) target = $region49
  $region48: #{revgrad_onestep_forward.1} parent=0 // pred_region
    _
  $region49: #{revgrad_onestep_forward.1} parent=0 // pred_fallthru
    _

</llo_original>
